<compile_context>
chip_gen: v5e
topology: v5e:2x2
jax: 0.10.0
libtpu: 0.0.40
codegen_flags: <defaults>
</compile_context>

<pallas_src>
import functools

import jax
import jax.numpy as jnp
from jax import lax
from jax.experimental import pallas as pl
from jax.experimental.pallas import tpu as pltpu


def _round_up(x, m):
    return ((x + m - 1) // m) * m


def _device_kind():
    try:
        return jax.devices()[0].device_kind.lower()
    except Exception:
        return ""


def _vmem_capacity_bytes():
    try:
        return int(pltpu.get_tpu_info().vmem_capacity_bytes)
    except Exception:
        kind = _device_kind()
        return (64 << 20) if "v7" in kind else (128 << 20)


def _pick_tm(n_pad):
    # v5-class (and older) MXUs are 128-wide: TM=256 buys nothing there and
    # doubles every [N_pad, TM] temporary.  Keep 256 for the 256-wide v6e/v7x.
    kind = _device_kind()
    wide_mxu = not any(v in kind for v in ("v2", "v3", "v4", "v5"))
    if wide_mxu and n_pad % 256 == 0:
        return 256
    return 128


def _nearby_patch_cl_kernel(ids_col_ref, idx_col_ref, ids_anc_ref, idx_anc_ref,
                            contrast_ref, out_ref, *,
                            inv_temperature, loss_scale, inv_pos_cnt,
                            n_valid, tm, padded):
    """Per-tile: all-rows x TM-anchors similarities, reductions along sublanes.

    contrast_ref: [N_pad, D_pad] (bf16 or f32), resident (constant index_map).
    ids_*/idx_*:  tiny int32 sample-id / global-row-index vectors.
    out_ref:      [1, TM] f32 per-anchor losses (lane-dense).
    """
    i = pl.program_id(0)
    row0 = pl.multiple_of(i * tm, tm)

    contrast = contrast_ref[...]                                # [N_pad, D_pad]
    anchor = contrast_ref[pl.ds(row0, tm), :]                   # [TM, D_pad]

    # sims[j, a] = <contrast_j, anchor_a> / temperature.  Anchors live on the
    # LANE axis so every per-anchor reduction is axis=0 and the result is a
    # lane-dense [1, TM] row.  f32 accumulation regardless of input dtype.
    sims = lax.dot_general(
        contrast, anchor,
        dimension_numbers=(((1,), (1,)), ((), ())),
        preferred_element_type=jnp.float32,
    ) * inv_temperature                                         # [N_pad, TM]

    ids_col = ids_col_ref[...]                                  # [N_pad, 1]
    idx_col = idx_col_ref[...]                                  # [N_pad, 1]
    ids_anc = ids_anc_ref[...]                                  # [1, TM]
    idx_anc = idx_anc_ref[...]                                  # [1, TM]

    # Masks from broadcasted compares (no modulo, no full-tile iota).
    same = ids_col == ids_anc                                   # [N_pad, TM]
    diag = idx_col == idx_anc                                   # [N_pad, TM]
    pos = jnp.logical_and(same, jnp.logical_not(diag))
    neg = jnp.logical_not(same)

    if padded:
        # Padded contrast rows (zero feature vectors, id = -1) must not enter
        # the negative sum or the row max.  Padded anchor LANES are handled by
        # the final lane_valid select, so no a-side mask is needed.
        j_valid = idx_col < n_valid                             # [N_pad, 1]
        neg = jnp.logical_and(neg, j_valid)
        anchor_max = jnp.max(jnp.where(j_valid, sims, jnp.float32(-1e30)),
                             axis=0, keepdims=True)             # [1, TM]
    else:
        anchor_max = jnp.max(sims, axis=0, keepdims=True)       # [1, TM]

    logits = sims - anchor_max                                  # [N_pad, TM]

    # Denominator: sum over negatives.  where() (not multiply) keeps garbage
    # from padded entries out of the sum (no inf*0 NaNs).
    exp_neg = jnp.where(neg, jnp.exp(logits), 0.0)
    log_denom = jnp.log(jnp.sum(exp_neg, axis=0, keepdims=True))  # [1, TM]

    # mean log-prob over positives:
    #   sum(pos*log_prob)/(n_views-1) = sum(pos*logits)*inv_pos_cnt - log_denom
    pos_logit_sum = jnp.sum(jnp.where(pos, logits, 0.0), axis=0, keepdims=True)
    mean_log_prob_pos = pos_logit_sum * inv_pos_cnt - log_denom  # [1, TM]

    per_anchor_loss = loss_scale * mean_log_prob_pos             # -(t/bt)*mean

    if padded:
        # Keep this as a SELECT: padded lanes can legitimately contain +/-inf
        # intermediates; a multiply-mask would turn them into NaN.
        lane_valid = idx_anc < n_valid                           # [1, TM]
        per_anchor_loss = jnp.where(lane_valid, per_anchor_loss, 0.0)

    out_ref[...] = per_anchor_loss


def nearby_patch_cl_loss(features, temperature=0.07, contrast_mode='all',
                         base_temperature=0.07, matmul_dtype=jnp.bfloat16):
    """JAX/Pallas equivalent of NearbyPatchCL.forward(features) (labels=mask=None)."""
    if features.ndim < 3:
        raise ValueError('`features` needs to be [bsz, n_views, ...]')
    if contrast_mode != 'all':
        # TODO(synk): contrast_mode='one' (rectangular anchor block) not implemented.
        raise ValueError('Only contrast_mode="all" is implemented')

    bsz, n_views = features.shape[0], features.shape[1]
    if n_views < 2:
        raise ValueError('n_views must be >= 2 (with a single view there are no '
                         'positives and the PyTorch reference divides by zero)')

    feats = features.reshape(bsz, n_views, -1).astype(jnp.float32)
    d0 = feats.shape[-1]
    n_valid = n_views * bsz

    # contrast_feature = torch.cat(torch.unbind(features, dim=1), dim=0) -> [N, D]
    contrast = jnp.transpose(feats, (1, 0, 2)).reshape(n_valid, d0)

    # Pad to MXU/vreg-friendly shapes; padded rows are zero feature vectors and
    # are masked out in-kernel (only when padding actually exists).
    d_pad = _round_up(d0, 128)
    n_pad = _round_up(n_valid, 128)
    contrast = jnp.pad(contrast, ((0, n_pad - n_valid), (0, d_pad - d0)))
    if matmul_dtype is not None:
        contrast = contrast.astype(matmul_dtype)   # one wrapper-side cast, not per-tile

    # Tiny int32 helper vectors: global row index and sample id (row % bsz,
    # -1 for padded rows so they never match a valid anchor's id).
    idx = jnp.arange(n_pad, dtype=jnp.int32)
    ids = jnp.where(idx < n_valid, idx % bsz, -1).astype(jnp.int32)
    ids_col = ids.reshape(n_pad, 1)
    idx_col = idx.reshape(n_pad, 1)
    ids_row = ids.reshape(1, n_pad)
    idx_row = idx.reshape(1, n_pad)

    tm = _pick_tm(n_pad)
    grid = (n_pad // tm,)
    padded = n_valid != n_pad

    # VMEM budget: resident contrast (counted for the double-buffered fallback)
    # + [N_pad, TM] f32 temporaries + tiny id vectors + slack; clamp to this
    # generation's capacity minus headroom.
    itemsize = jnp.dtype(contrast.dtype).itemsize
    est = (2 * n_pad * d_pad * itemsize
           + 8 * n_pad * tm * 4
           + 16 * n_pad * 4
           + (4 << 20))
    cap = _vmem_capacity_bytes()
    vmem_limit = int(max(min(est, cap - (16 << 20)), 32 << 20))

    kernel = functools.partial(
        _nearby_patch_cl_kernel,
        inv_temperature=float(1.0 / temperature),
        loss_scale=float(-(temperature / base_temperature)),
        inv_pos_cnt=float(1.0 / (n_views - 1)),
        n_valid=int(n_valid),
        tm=int(tm),
        padded=bool(padded),
    )

    out_shape = jax.ShapeDtypeStruct((1, n_pad), jnp.float32)
    compiler_params = pltpu.CompilerParams(
        dimension_semantics=("parallel",),
        vmem_limit_bytes=vmem_limit)

    def _run(single_buffer_resident):
        resident_kwargs = (
            dict(pipeline_mode=pl.Buffered(1)) if single_buffer_resident else {})
        in_specs = [
            # Resident (constant index map) operands: single-buffered if supported.
            pl.BlockSpec((n_pad, 1), lambda i: (0, 0), **resident_kwargs),   # ids_col
            pl.BlockSpec((n_pad, 1), lambda i: (0, 0), **resident_kwargs),   # idx_col
            pl.BlockSpec((1, tm), lambda i: (0, i)),                          # ids_anchor
            pl.BlockSpec((1, tm), lambda i: (0, i)),                          # idx_anchor
            pl.BlockSpec((n_pad, d_pad), lambda i: (0, 0), **resident_kwargs),  # contrast
        ]
        call = pl.pallas_call(
            kernel,
            out_shape=out_shape,
            grid=grid,
            in_specs=in_specs,
            # Lane-dense per-anchor losses: each tile writes a [1, TM] slab.
            out_specs=pl.BlockSpec((1, tm), lambda i: (0, i)),
            compiler_params=compiler_params,
        )
        return call(ids_col, idx_col, ids_row, idx_row, contrast)

    try:
        per_anchor = _run(True)
    except Exception:
        # Fallback for JAX versions that reject pipeline_mode=pl.Buffered(1).
        per_anchor = _run(False)

    # Final scalar mean over the N real anchors (padded lanes are exact zeros).
    return jnp.sum(per_anchor) / n_valid


def _reference_loss(features, temperature=0.07, base_temperature=0.07):
    """Pure-JAX reference mirroring the PyTorch forward (labels=mask=None, 'all')."""
    bsz, n_views = features.shape[0], features.shape[1]
    feats = features.reshape(bsz, n_views, -1).astype(jnp.float32)
    n = n_views * bsz
    contrast = jnp.transpose(feats, (1, 0, 2)).reshape(n, -1)
    sims = jnp.dot(contrast, contrast.T,
                   precision=jax.lax.Precision.HIGHEST) / temperature
    logits = sims - jnp.max(sims, axis=1, keepdims=True)
    ids = jnp.arange(n) % bsz
    same = (ids[:, None] == ids[None, :]).astype(jnp.float32)
    eye = jnp.eye(n, dtype=jnp.float32)
    pos_mask = same * (1.0 - eye)
    neg_mask = 1.0 - same
    exp_logits = jnp.exp(logits) * neg_mask
    log_prob = logits - jnp.log(jnp.sum(exp_logits, axis=1, keepdims=True))
    mean_log_prob_pos = jnp.sum(pos_mask * log_prob, axis=1) / jnp.sum(pos_mask, axis=1)
    loss = -(temperature / base_temperature) * mean_log_prob_pos
    return jnp.mean(loss)


if __name__ == "__main__":
    key = jax.random.PRNGKey(0)
    # features: [bsz=8, n_views=2, C=4, S=8] -> flattened D=32, N=16.
    # SupCon/SimCLR losses consume L2-normalized embeddings; unnormalized random
    # features make exp((sims - max)/0.07) underflow to 0 for every negative and
    # the loss is -inf for the kernel AND the PyTorch reference alike.
    raw = jax.random.normal(key, (8, 2, 4, 8), dtype=jnp.float32)
    flat = raw.reshape(8, 2, -1)
    flat = flat / jnp.linalg.norm(flat, axis=-1, keepdims=True)
    features = flat.reshape(8, 2, 4, 8)

    loss = jax.block_until_ready(nearby_patch_cl_loss(features))
    ref = jax.block_until_ready(_reference_loss(features))

    assert jnp.isfinite(loss), f"kernel produced non-finite loss: {loss}"
    assert jnp.isfinite(ref), f"reference produced non-finite loss: {ref}"
    # Tolerance accounts for the bf16 MXU inputs (f32 accumulation) vs. the
    # HIGHEST-precision f32 XLA reference.
    assert jnp.allclose(loss, ref, rtol=2e-2, atol=2e-2), (loss, ref)

    print("KERNEL_OK")
</pallas_src>

<mosaic_0001>
module attributes {stable_mosaic.version = 11 : i64} {
  func.func @_nearby_patch_cl_kernel(%arg0: i32, %arg1: memref<128x1xi32, #tpu.memory_space<vmem>>, %arg2: memref<128x1xi32, #tpu.memory_space<vmem>>, %arg3: memref<1x128xi32, #tpu.memory_space<vmem>>, %arg4: memref<1x128xi32, #tpu.memory_space<vmem>>, %arg5: memref<128x128xbf16, #tpu.memory_space<vmem>>, %arg6: memref<1x128xf32, #tpu.memory_space<vmem>>) attributes {dimension_semantics = [#tpu.dimension_semantics<parallel>], iteration_bounds = array<i64: 1>, scalar_prefetch = 0 : i64, scratch_operands = 0 : i64, tpu.core_type = #tpu.core_type<tc>, window_params = [{pipeline_mode = #tpu.pipeline_mode<synchronous>, transform_indices = @transform_0, window_bounds = array<i64: 128, 1>}, {pipeline_mode = #tpu.pipeline_mode<synchronous>, transform_indices = @transform_1, window_bounds = array<i64: 128, 1>}, {transform_indices = @transform_2, window_bounds = array<i64: 1, 128>}, {transform_indices = @transform_3, window_bounds = array<i64: 1, 128>}, {pipeline_mode = #tpu.pipeline_mode<synchronous>, transform_indices = @transform_4, window_bounds = array<i64: 128, 128>}, {transform_indices = @transform_5, window_bounds = array<i64: 1, 128>}]} {
    %c128_i32 = arith.constant 128 : i32
    %0 = arith.muli %arg0, %c128_i32 : i32
    %1 = tpu.assume_multiple %0, 128 : i32
    %c0 = arith.constant 0 : index
    %c0_0 = arith.constant 0 : index
    %2 = vector.load %arg5[%c0, %c0_0] : memref<128x128xbf16, #tpu.memory_space<vmem>>, vector<128x128xbf16>
    %3 = arith.index_cast %1 : i32 to index
    %c0_1 = arith.constant 0 : index
    %4 = vector.load %arg5[%3, %c0_1] : memref<128x128xbf16, #tpu.memory_space<vmem>>, vector<128x128xbf16>
    %cst = arith.constant dense<0.000000e+00> : vector<128x128xf32>
    %5 = tpu.matmul %2, %4, %cst {dimension_numbers = #tpu.dot_dimension_numbers<[1], [1], [0], [0], [0, 0, 1, 0], [], []>} : vector<128x128xbf16>, vector<128x128xbf16>, vector<128x128xf32> -> vector<128x128xf32>
    %cst_2 = arith.constant 14.2857141 : f32
    %6 = vector.broadcast %cst_2 : f32 to vector<128x128xf32>
    %7 = arith.mulf %5, %6 : vector<128x128xf32>
    %c0_3 = arith.constant 0 : index
    %c0_4 = arith.constant 0 : index
    %8 = vector.load %arg1[%c0_3, %c0_4] : memref<128x1xi32, #tpu.memory_space<vmem>>, vector<128x1xi32>
    %c0_5 = arith.constant 0 : index
    %c0_6 = arith.constant 0 : index
    %9 = vector.load %arg2[%c0_5, %c0_6] : memref<128x1xi32, #tpu.memory_space<vmem>>, vector<128x1xi32>
    %c0_7 = arith.constant 0 : index
    %c0_8 = arith.constant 0 : index
    %10 = vector.load %arg3[%c0_7, %c0_8] : memref<1x128xi32, #tpu.memory_space<vmem>>, vector<1x128xi32>
    %c0_9 = arith.constant 0 : index
    %c0_10 = arith.constant 0 : index
    %11 = vector.load %arg4[%c0_9, %c0_10] : memref<1x128xi32, #tpu.memory_space<vmem>>, vector<1x128xi32>
    %12 = vector.broadcast %8 : vector<128x1xi32> to vector<128x128xi32>
    %13 = vector.broadcast %10 : vector<1x128xi32> to vector<128x128xi32>
    %14 = arith.cmpi eq, %12, %13 : vector<128x128xi32>
    %15 = vector.broadcast %9 : vector<128x1xi32> to vector<128x128xi32>
    %16 = vector.broadcast %11 : vector<1x128xi32> to vector<128x128xi32>
    %17 = arith.cmpi eq, %15, %16 : vector<128x128xi32>
    %cst_11 = arith.constant dense<true> : vector<128x128xi1>
    %18 = arith.xori %17, %cst_11 : vector<128x128xi1>
    %19 = arith.andi %14, %18 : vector<128x128xi1>
    %cst_12 = arith.constant dense<true> : vector<128x128xi1>
    %20 = arith.xori %14, %cst_12 : vector<128x128xi1>
    %c16_i32 = arith.constant 16 : i32
    %21 = vector.broadcast %c16_i32 : i32 to vector<128x1xi32>
    %22 = arith.cmpi slt, %9, %21 : vector<128x1xi32>
    %23 = vector.broadcast %22 : vector<128x1xi1> to vector<128x128xi1>
    %24 = arith.andi %20, %23 : vector<128x128xi1>
    %cst_13 = arith.constant -1.000000e+30 : f32
    %25 = vector.shape_cast %22 : vector<128x1xi1> to vector<128x1xi1>
    %26 = vector.broadcast %25 : vector<128x1xi1> to vector<128x128xi1>
    %27 = vector.broadcast %cst_13 : f32 to vector<128x128xf32>
    %28 = arith.select %26, %7, %27 : vector<128x128xi1>, vector<128x128xf32>
    %cst_14 = arith.constant dense<0xFF800000> : vector<128xf32>
    %29 = vector.multi_reduction <maximumf>, %28, %cst_14 [0] : vector<128x128xf32> to vector<128xf32>
    %30 = vector.shape_cast %29 : vector<128xf32> to vector<1x128xf32>
    %31 = vector.broadcast %30 : vector<1x128xf32> to vector<128x128xf32>
    %32 = arith.subf %7, %31 : vector<128x128xf32>
    %33 = math.exp %32 : vector<128x128xf32>
    %cst_15 = arith.constant 0.000000e+00 : f32
    %34 = vector.broadcast %cst_15 : f32 to vector<128x128xf32>
    %35 = arith.select %24, %33, %34 : vector<128x128xi1>, vector<128x128xf32>
    %cst_16 = arith.constant dense<0.000000e+00> : vector<128xf32>
    %36 = vector.multi_reduction <add>, %35, %cst_16 [0] : vector<128x128xf32> to vector<128xf32>
    %37 = vector.shape_cast %36 : vector<128xf32> to vector<1x128xf32>
    %38 = math.log %37 : vector<1x128xf32>
    %cst_17 = arith.constant 0.000000e+00 : f32
    %39 = vector.broadcast %cst_17 : f32 to vector<128x128xf32>
    %40 = arith.select %19, %32, %39 : vector<128x128xi1>, vector<128x128xf32>
    %cst_18 = arith.constant dense<0.000000e+00> : vector<128xf32>
    %41 = vector.multi_reduction <add>, %40, %cst_18 [0] : vector<128x128xf32> to vector<128xf32>
    %42 = vector.shape_cast %41 : vector<128xf32> to vector<1x128xf32>
    %cst_19 = arith.constant 1.000000e+00 : f32
    %43 = vector.broadcast %cst_19 : f32 to vector<1x128xf32>
    %44 = arith.mulf %42, %43 : vector<1x128xf32>
    %45 = arith.subf %44, %38 : vector<1x128xf32>
    %cst_20 = arith.constant -1.000000e+00 : f32
    %46 = vector.broadcast %cst_20 : f32 to vector<1x128xf32>
    %47 = arith.mulf %46, %45 : vector<1x128xf32>
    %c16_i32_21 = arith.constant 16 : i32
    %48 = vector.broadcast %c16_i32_21 : i32 to vector<1x128xi32>
    %49 = arith.cmpi slt, %11, %48 : vector<1x128xi32>
    %cst_22 = arith.constant 0.000000e+00 : f32
    %50 = vector.broadcast %cst_22 : f32 to vector<1x128xf32>
    %51 = arith.select %49, %47, %50 : vector<1x128xi1>, vector<1x128xf32>
    %c0_23 = arith.constant 0 : index
    %c0_24 = arith.constant 0 : index
    %52 = vector.load %arg6[%c0_23, %c0_24] : memref<1x128xf32, #tpu.memory_space<vmem>>, vector<1x128xf32>
    tpu.vector_store %arg6[%c0_23, %c0_24], %51 {strides = array<i32>} : memref<1x128xf32, #tpu.memory_space<vmem>>, vector<1x128xf32>,
    return
  }
  func.func @transform_0(%arg0: i32) -> (i32, i32) {
    %c0_i32 = arith.constant 0 : i32
    %c0_i32_0 = arith.constant 0 : i32
    %c0_i32_1 = arith.constant 0 : i32
    return %c0_i32, %c0_i32_0 : i32, i32
  }
  func.func @transform_1(%arg0: i32) -> (i32, i32) {
    %c0_i32 = arith.constant 0 : i32
    %c0_i32_0 = arith.constant 0 : i32
    %c0_i32_1 = arith.constant 0 : i32
    return %c0_i32, %c0_i32_0 : i32, i32
  }
  func.func @transform_2(%arg0: i32) -> (i32, i32) {
    %c0_i32 = arith.constant 0 : i32
    %c0_i32_0 = arith.constant 0 : i32
    return %c0_i32, %arg0 : i32, i32
  }
  func.func @transform_3(%arg0: i32) -> (i32, i32) {
    %c0_i32 = arith.constant 0 : i32
    %c0_i32_0 = arith.constant 0 : i32
    return %c0_i32, %arg0 : i32, i32
  }
  func.func @transform_4(%arg0: i32) -> (i32, i32) {
    %c0_i32 = arith.constant 0 : i32
    %c0_i32_0 = arith.constant 0 : i32
    %c0_i32_1 = arith.constant 0 : i32
    return %c0_i32, %c0_i32_0 : i32, i32
  }
  func.func @transform_5(%arg0: i32) -> (i32, i32) {
    %c0_i32 = arith.constant 0 : i32
    %c0_i32_0 = arith.constant 0 : i32
    return %c0_i32, %arg0 : i32, i32
  }
}

module attributes {stable_mosaic.version = 11 : i64} {
  func.func @_nearby_patch_cl_kernel(%arg0: i32, %arg1: memref<128x1xi32, #tpu.memory_space<vmem>>, %arg2: memref<128x1xi32, #tpu.memory_space<vmem>>, %arg3: memref<1x128xi32, #tpu.memory_space<vmem>>, %arg4: memref<1x128xi32, #tpu.memory_space<vmem>>, %arg5: memref<128x128xbf16, #tpu.memory_space<vmem>>, %arg6: memref<1x128xf32, #tpu.memory_space<vmem>>) attributes {dimension_semantics = [#tpu.dimension_semantics<parallel>], iteration_bounds = array<i64: 1>, scalar_prefetch = 0 : i64, scratch_operands = 0 : i64, tpu.core_type = #tpu.core_type<tc>, window_params = [{pipeline_mode = #tpu.pipeline_mode<synchronous>, transform_indices = @transform_0, window_bounds = array<i64: 128, 1>}, {pipeline_mode = #tpu.pipeline_mode<synchronous>, transform_indices = @transform_1, window_bounds = array<i64: 128, 1>}, {transform_indices = @transform_2, window_bounds = array<i64: 1, 128>}, {transform_indices = @transform_3, window_bounds = array<i64: 1, 128>}, {pipeline_mode = #tpu.pipeline_mode<synchronous>, transform_indices = @transform_4, window_bounds = array<i64: 128, 128>}, {transform_indices = @transform_5, window_bounds = array<i64: 1, 128>}]} {
    %c128_i32 = arith.constant 128 : i32
    %0 = arith.muli %arg0, %c128_i32 : i32
    %1 = tpu.assume_multiple %0, 128 : i32
    %c0 = arith.constant 0 : index
    %c0_0 = arith.constant 0 : index
    %2 = vector.load %arg5[%c0, %c0_0] : memref<128x128xbf16, #tpu.memory_space<vmem>>, vector<128x128xbf16>
    %3 = arith.index_cast %1 : i32 to index
    %c0_1 = arith.constant 0 : index
    %4 = vector.load %arg5[%3, %c0_1] : memref<128x128xbf16, #tpu.memory_space<vmem>>, vector<128x128xbf16>
    %cst = arith.constant dense<0.000000e+00> : vector<128x128xf32>
    %5 = tpu.matmul %2, %4, %cst {dimension_numbers = #tpu.dot_dimension_numbers<[1], [1], [0], [0], [0, 0, 1, 0], [], []>} : vector<128x128xbf16>, vector<128x128xbf16>, vector<128x128xf32> -> vector<128x128xf32>
    %cst_2 = arith.constant 14.2857141 : f32
    %6 = vector.broadcast %cst_2 : f32 to vector<128x128xf32>
    %7 = arith.mulf %5, %6 : vector<128x128xf32>
    %c0_3 = arith.constant 0 : index
    %c0_4 = arith.constant 0 : index
    %8 = vector.load %arg1[%c0_3, %c0_4] : memref<128x1xi32, #tpu.memory_space<vmem>>, vector<128x1xi32>
    %c0_5 = arith.constant 0 : index
    %c0_6 = arith.constant 0 : index
    %9 = vector.load %arg2[%c0_5, %c0_6] : memref<128x1xi32, #tpu.memory_space<vmem>>, vector<128x1xi32>
    %c0_7 = arith.constant 0 : index
    %c0_8 = arith.constant 0 : index
    %10 = vector.load %arg3[%c0_7, %c0_8] : memref<1x128xi32, #tpu.memory_space<vmem>>, vector<1x128xi32>
    %c0_9 = arith.constant 0 : index
    %c0_10 = arith.constant 0 : index
    %11 = vector.load %arg4[%c0_9, %c0_10] : memref<1x128xi32, #tpu.memory_space<vmem>>, vector<1x128xi32>
    %12 = vector.broadcast %8 : vector<128x1xi32> to vector<128x128xi32>
    %13 = vector.broadcast %10 : vector<1x128xi32> to vector<128x128xi32>
    %14 = arith.cmpi eq, %12, %13 : vector<128x128xi32>
    %15 = vector.broadcast %9 : vector<128x1xi32> to vector<128x128xi32>
    %16 = vector.broadcast %11 : vector<1x128xi32> to vector<128x128xi32>
    %17 = arith.cmpi eq, %15, %16 : vector<128x128xi32>
    %cst_11 = arith.constant dense<true> : vector<128x128xi1>
    %18 = arith.xori %17, %cst_11 : vector<128x128xi1>
    %19 = arith.andi %14, %18 : vector<128x128xi1>
    %cst_12 = arith.constant dense<true> : vector<128x128xi1>
    %20 = arith.xori %14, %cst_12 : vector<128x128xi1>
    %c16_i32 = arith.constant 16 : i32
    %21 = vector.broadcast %c16_i32 : i32 to vector<128x1xi32>
    %22 = arith.cmpi slt, %9, %21 : vector<128x1xi32>
    %23 = vector.broadcast %22 : vector<128x1xi1> to vector<128x128xi1>
    %24 = arith.andi %20, %23 : vector<128x128xi1>
    %cst_13 = arith.constant -1.000000e+30 : f32
    %25 = vector.shape_cast %22 : vector<128x1xi1> to vector<128x1xi1>
    %26 = vector.broadcast %25 : vector<128x1xi1> to vector<128x128xi1>
    %27 = vector.broadcast %cst_13 : f32 to vector<128x128xf32>
    %28 = arith.select %26, %7, %27 : vector<128x128xi1>, vector<128x128xf32>
    %cst_14 = arith.constant dense<0xFF800000> : vector<128xf32>
    %29 = vector.multi_reduction <maximumf>, %28, %cst_14 [0] : vector<128x128xf32> to vector<128xf32>
    %30 = vector.shape_cast %29 : vector<128xf32> to vector<1x128xf32>
    %31 = vector.broadcast %30 : vector<1x128xf32> to vector<128x128xf32>
    %32 = arith.subf %7, %31 : vector<128x128xf32>
    %33 = math.exp %32 : vector<128x128xf32>
    %cst_15 = arith.constant 0.000000e+00 : f32
    %34 = vector.broadcast %cst_15 : f32 to vector<128x128xf32>
    %35 = arith.select %24, %33, %34 : vector<128x128xi1>, vector<128x128xf32>
    %cst_16 = arith.constant dense<0.000000e+00> : vector<128xf32>
    %36 = vector.multi_reduction <add>, %35, %cst_16 [0] : vector<128x128xf32> to vector<128xf32>
    %37 = vector.shape_cast %36 : vector<128xf32> to vector<1x128xf32>
    %38 = math.log %37 : vector<1x128xf32>
    %cst_17 = arith.constant 0.000000e+00 : f32
    %39 = vector.broadcast %cst_17 : f32 to vector<128x128xf32>
    %40 = arith.select %19, %32, %39 : vector<128x128xi1>, vector<128x128xf32>
    %cst_18 = arith.constant dense<0.000000e+00> : vector<128xf32>
    %41 = vector.multi_reduction <add>, %40, %cst_18 [0] : vector<128x128xf32> to vector<128xf32>
    %42 = vector.shape_cast %41 : vector<128xf32> to vector<1x128xf32>
    %cst_19 = arith.constant 1.000000e+00 : f32
    %43 = vector.broadcast %cst_19 : f32 to vector<1x128xf32>
    %44 = arith.mulf %42, %43 : vector<1x128xf32>
    %45 = arith.subf %44, %38 : vector<1x128xf32>
    %cst_20 = arith.constant -1.000000e+00 : f32
    %46 = vector.broadcast %cst_20 : f32 to vector<1x128xf32>
    %47 = arith.mulf %46, %45 : vector<1x128xf32>
    %c16_i32_21 = arith.constant 16 : i32
    %48 = vector.broadcast %c16_i32_21 : i32 to vector<1x128xi32>
    %49 = arith.cmpi slt, %11, %48 : vector<1x128xi32>
    %cst_22 = arith.constant 0.000000e+00 : f32
    %50 = vector.broadcast %cst_22 : f32 to vector<1x128xf32>
    %51 = arith.select %49, %47, %50 : vector<1x128xi1>, vector<1x128xf32>
    %c0_23 = arith.constant 0 : index
    %c0_24 = arith.constant 0 : index
    %52 = vector.load %arg6[%c0_23, %c0_24] : memref<1x128xf32, #tpu.memory_space<vmem>>, vector<1x128xf32>
    tpu.vector_store %arg6[%c0_23, %c0_24], %51 {strides = array<i32>} : memref<1x128xf32, #tpu.memory_space<vmem>>, vector<1x128xf32>,
    return
  }
  func.func @transform_0(%arg0: i32) -> (i32, i32) {
    %c0_i32 = arith.constant 0 : i32
    %c0_i32_0 = arith.constant 0 : i32
    %c0_i32_1 = arith.constant 0 : i32
    return %c0_i32, %c0_i32_0 : i32, i32
  }
  func.func @transform_1(%arg0: i32) -> (i32, i32) {
    %c0_i32 = arith.constant 0 : i32
    %c0_i32_0 = arith.constant 0 : i32
    %c0_i32_1 = arith.constant 0 : i32
    return %c0_i32, %c0_i32_0 : i32, i32
  }
  func.func @transform_2(%arg0: i32) -> (i32, i32) {
    %c0_i32 = arith.constant 0 : i32
    %c0_i32_0 = arith.constant 0 : i32
    return %c0_i32, %arg0 : i32, i32
  }
  func.func @transform_3(%arg0: i32) -> (i32, i32) {
    %c0_i32 = arith.constant 0 : i32
    %c0_i32_0 = arith.constant 0 : i32
    return %c0_i32, %arg0 : i32, i32
  }
  func.func @transform_4(%arg0: i32) -> (i32, i32) {
    %c0_i32 = arith.constant 0 : i32
    %c0_i32_0 = arith.constant 0 : i32
    %c0_i32_1 = arith.constant 0 : i32
    return %c0_i32, %c0_i32_0 : i32, i32
  }
  func.func @transform_5(%arg0: i32) -> (i32, i32) {
    %c0_i32 = arith.constant 0 : i32
    %c0_i32_0 = arith.constant 0 : i32
    return %c0_i32, %arg0 : i32, i32
  }
}

</mosaic_0001>

<llo_original>
// kernel: tpu_custom_call.1
$region0: #{tpu_custom_call.1}
  #allocation0 [shape = 'u32[]', space=smem, size = 0x4, offset = 0x4, fixed_abs, tag = 'smem constant byte address 0x4 - core index']
  #allocation1 [shape = 'u32[72,128]{1,0:T(1,128)}', space=vmem, size = 0x9000, scoped, tag = 'internal scratch']
  %s0 = inlined_call_operand.vmem [shape: s32[128,1], index: 0, kind: input, shape index: {}]
  %s1 = inlined_call_operand.vmem [shape: s32[128,1], index: 1, kind: input, shape index: {}]
  %s2 = inlined_call_operand.vmem [shape: s32[1,128], index: 2, kind: input, shape index: {}]
  %s3 = inlined_call_operand.vmem [shape: s32[1,128], index: 3, kind: input, shape index: {}]
  %s4 = inlined_call_operand.vmem [shape: bf16[128,128], index: 4, kind: input, shape index: {}]
  %s5 = inlined_call_operand.hbm [shape: f32[1,128], index: 5, kind: output, shape index: {}]
  %s6 = sld [smem:[#allocation0]]
  $region30: #{tpu_custom_call.1} parent=0
    _
  %s8 = ssub.s32 1, %s6
  %s9 = scalar_select 0, %s8, %s6
  $region1: #{tpu_custom_call.1} parent=0
    #allocation2 [shape = 'u8[512]{0}', space=vmem, size = 0x400, scoped, tag = 'output window, operand 0, single buffered']
    #allocation3 [shape = 's32[1]{0}', space=sflag, size = 0x4, scoped, tag = 'scoped memory for tpu_custom_call.1']
    %10 = vsyncpa [#allocation3], 0
    // Predicated region
    $region2: #{tpu_custom_call.1} parent=1 // pred_check
      _
    $region3: #{tpu_custom_call.1} parent=1 // pred_check_branch
      %12 = sbr.rel (0) target = $region5
    $region4: #{tpu_custom_call.1} parent=1 // pred_region
      _
    $region5: #{tpu_custom_call.1} parent=1 // pred_fallthru
      _
    // Predicated region
    $region6: #{tpu_custom_call.1} parent=1 // pred_check
      _
    $region7: #{tpu_custom_call.1} parent=1 // pred_check_branch
      %14 = sbr.rel (0) target = $region9
    $region8: #{tpu_custom_call.1} parent=1 // pred_region
      _
    $region9: #{tpu_custom_call.1} parent=1 // pred_fallthru
      _
    // Predicated region
    $region10: #{tpu_custom_call.1} parent=1 // pred_check
      _
    $region11: #{tpu_custom_call.1} parent=1 // pred_check_branch
      %16 = sbr.rel (0) target = $region13
    $region12: #{tpu_custom_call.1} parent=1 // pred_region
      _
    $region13: #{tpu_custom_call.1} parent=1 // pred_fallthru
      _
    // Predicated region
    $region14: #{tpu_custom_call.1} parent=1 // pred_check
      _
    $region15: #{tpu_custom_call.1} parent=1 // pred_check_branch
      %18 = sbr.rel (0) target = $region17
    $region16: #{tpu_custom_call.1} parent=1 // pred_region
      _
    $region17: #{tpu_custom_call.1} parent=1 // pred_fallthru
      _
    // Predicated region
    $region18: #{tpu_custom_call.1} parent=1 // pred_check
      _
    $region19: #{tpu_custom_call.1} parent=1 // pred_check_branch
      %20 = sbr.rel (0) target = $region21
    $region20: #{tpu_custom_call.1} parent=1 // pred_region
      _
    $region21: #{tpu_custom_call.1} parent=1 // pred_fallthru
      _
    %s21 = smul.u32 0, 128
    %v22 = vld [vmem:[%s4] sm:$0xf]
    %v23 = vld [vmem:[%s4 + $0x4] sm:$0xf]
    %v24 = vld [vmem:[%s4 + $0x8] sm:$0xf]
    %v25 = vld [vmem:[%s4 + $0xc] sm:$0xf]
    %v26 = vld [vmem:[%s4 + $0x10] sm:$0xf]
    %v27 = vld [vmem:[%s4 + $0x14] sm:$0xf]
    %v28 = vld [vmem:[%s4 + $0x18] sm:$0xf]
    %v29 = vld [vmem:[%s4 + $0x1c] sm:$0xf]
    %v30 = vld [vmem:[%s4 + $0x20] sm:$0xf]
    %v31 = vld [vmem:[%s4 + $0x24] sm:$0xf]
    %v32 = vld [vmem:[%s4 + $0x28] sm:$0xf]
    %v33 = vld [vmem:[%s4 + $0x2c] sm:$0xf]
    %v34 = vld [vmem:[%s4 + $0x30] sm:$0xf]
    %v35 = vld [vmem:[%s4 + $0x34] sm:$0xf]
    %v36 = vld [vmem:[%s4 + $0x38] sm:$0xf]
    %v37 = vld [vmem:[%s4 + $0x3c] sm:$0xf]
    %s38 = sshra.s32 %s21, 3
    %s39 = sand.u32 %s21, 7
    %s40 = smul.addr %s38, 4
    %s41 = scalar_lea.vmem %s4, %s40
    %v42 = vld [vmem:[%s41] sm:$0xf]
    %v43 = vld [vmem:[%s41 + $0x4] sm:$0xf]
    %v44 = vld [vmem:[%s41 + $0x8] sm:$0xf]
    %v45 = vld [vmem:[%s41 + $0xc] sm:$0xf]
    %v46 = vld [vmem:[%s41 + $0x10] sm:$0xf]
    %v47 = vld [vmem:[%s41 + $0x14] sm:$0xf]
    %v48 = vld [vmem:[%s41 + $0x18] sm:$0xf]
    %v49 = vld [vmem:[%s41 + $0x1c] sm:$0xf]
    %v50 = vld [vmem:[%s41 + $0x20] sm:$0xf]
    %v51 = vld [vmem:[%s41 + $0x24] sm:$0xf]
    %v52 = vld [vmem:[%s41 + $0x28] sm:$0xf]
    %v53 = vld [vmem:[%s41 + $0x2c] sm:$0xf]
    %v54 = vld [vmem:[%s41 + $0x30] sm:$0xf]
    %v55 = vld [vmem:[%s41 + $0x34] sm:$0xf]
    %v56 = vld [vmem:[%s41 + $0x38] sm:$0xf]
    %v57 = vld [vmem:[%s41 + $0x3c] sm:$0xf]
    %v74 = vunpack.c.l.b16 %v22
    %v75 = vunpack.c.l.b16 %v23
    %v76 = vunpack.c.l.b16 %v24
    %v77 = vunpack.c.l.b16 %v25
    %v78 = vunpack.c.l.b16 %v26
    %v79 = vunpack.c.l.b16 %v27
    %v80 = vunpack.c.l.b16 %v28
    %v81 = vunpack.c.l.b16 %v29
    %v82 = vunpack.c.l.b16 %v30
    %v83 = vunpack.c.l.b16 %v31
    %v84 = vunpack.c.l.b16 %v32
    %v85 = vunpack.c.l.b16 %v33
    %v86 = vunpack.c.l.b16 %v34
    %v87 = vunpack.c.l.b16 %v35
    %v88 = vunpack.c.l.b16 %v36
    %v89 = vunpack.c.l.b16 %v37
    %v90 = vpack.c.b16 %v75, %v74
    %v91 = vpack.c.b16 %v77, %v76
    %v92 = vpack.c.b16 %v79, %v78
    %v93 = vpack.c.b16 %v81, %v80
    %v94 = vpack.c.b16 %v83, %v82
    %v95 = vpack.c.b16 %v85, %v84
    %v96 = vpack.c.b16 %v87, %v86
    %v97 = vpack.c.b16 %v89, %v88
    %v122 = vunpack.c.l.b16 %v42
    %v123 = vunpack.c.l.b16 %v43
    %v124 = vunpack.c.l.b16 %v44
    %v125 = vunpack.c.l.b16 %v45
    %v126 = vunpack.c.l.b16 %v46
    %v127 = vunpack.c.l.b16 %v47
    %v128 = vunpack.c.l.b16 %v48
    %v129 = vunpack.c.l.b16 %v49
    %v130 = vunpack.c.l.b16 %v50
    %v131 = vunpack.c.l.b16 %v51
    %v132 = vunpack.c.l.b16 %v52
    %v133 = vunpack.c.l.b16 %v53
    %v134 = vunpack.c.l.b16 %v54
    %v135 = vunpack.c.l.b16 %v55
    %v136 = vunpack.c.l.b16 %v56
    %v137 = vunpack.c.l.b16 %v57
    %v138 = vpack.c.b16 %v123, %v122
    %v139 = vpack.c.b16 %v125, %v124
    %v140 = vpack.c.b16 %v127, %v126
    %v141 = vpack.c.b16 %v129, %v128
    %v142 = vpack.c.b16 %v131, %v130
    %v143 = vpack.c.b16 %v133, %v132
    %v144 = vpack.c.b16 %v135, %v134
    %v145 = vpack.c.b16 %v137, %v136
    %154 = vmatpush.bf16.xpose.msra.mxu0 %v145
    %155 = vmatpush.bf16.xpose.msra.mxu0 %v144
    %156 = vmatpush.bf16.xpose.msra.mxu0 %v143
    %157 = vmatpush.bf16.xpose.msra.mxu0 %v142
    %158 = vmatpush.bf16.xpose.msra.mxu0 %v141
    %159 = vmatpush.bf16.xpose.msra.mxu0 %v140
    %160 = vmatpush.bf16.xpose.msra.mxu0 %v139
    %161 = vmatpush.bf16.xpose.msra.mxu0 %v138
    %162 = vmatmul.bf16.gmra.mxu0 %v90
    %v163 = vpop.f32.mrf.mxu0
    %v164 = vadd.f32 0.0, %v163
    %v165 = vpop.f32.mrf.mxu0
    %v166 = vadd.f32 0.0, %v165
    %167 = vmatmul.bf16.gmra.mxu0 %v91
    %v168 = vpop.f32.mrf.mxu0
    %v169 = vadd.f32 0.0, %v168
    %v170 = vpop.f32.mrf.mxu0
    %v171 = vadd.f32 0.0, %v170
    %172 = vmatmul.bf16.gmra.mxu0 %v92
    %v173 = vpop.f32.mrf.mxu0
    %v174 = vadd.f32 0.0, %v173
    %v175 = vpop.f32.mrf.mxu0
    %v176 = vadd.f32 0.0, %v175
    %177 = vmatmul.bf16.gmra.mxu0 %v93
    %v178 = vpop.f32.mrf.mxu0
    %v179 = vadd.f32 0.0, %v178
    %v180 = vpop.f32.mrf.mxu0
    %v181 = vadd.f32 0.0, %v180
    %182 = vmatmul.bf16.gmra.mxu0 %v94
    %v183 = vpop.f32.mrf.mxu0
    %v184 = vadd.f32 0.0, %v183
    %v185 = vpop.f32.mrf.mxu0
    %v186 = vadd.f32 0.0, %v185
    %187 = vmatmul.bf16.gmra.mxu0 %v95
    %v188 = vpop.f32.mrf.mxu0
    %v189 = vadd.f32 0.0, %v188
    %v190 = vpop.f32.mrf.mxu0
    %v191 = vadd.f32 0.0, %v190
    %192 = vmatmul.bf16.gmra.mxu0 %v96
    %v193 = vpop.f32.mrf.mxu0
    %v194 = vadd.f32 0.0, %v193
    %v195 = vpop.f32.mrf.mxu0
    %v196 = vadd.f32 0.0, %v195
    %197 = vmatmul.bf16.gmra.mxu0 %v97
    %v198 = vpop.f32.mrf.mxu0
    %v199 = vadd.f32 0.0, %v198
    %v200 = vpop.f32.mrf.mxu0
    %v201 = vadd.f32 0.0, %v200
    %202 = vdwg.mxu0
    %v203 = vmul.f32 %v164, 14.285714
    %v204 = vmul.f32 %v166, 14.285714
    %v205 = vmul.f32 %v169, 14.285714
    %v206 = vmul.f32 %v171, 14.285714
    %v207 = vmul.f32 %v174, 14.285714
    %v208 = vmul.f32 %v176, 14.285714
    %v209 = vmul.f32 %v179, 14.285714
    %v210 = vmul.f32 %v181, 14.285714
    %v211 = vmul.f32 %v184, 14.285714
    %v212 = vmul.f32 %v186, 14.285714
    %v213 = vmul.f32 %v189, 14.285714
    %v214 = vmul.f32 %v191, 14.285714
    %v215 = vmul.f32 %v194, 14.285714
    %v216 = vmul.f32 %v196, 14.285714
    %v217 = vmul.f32 %v199, 14.285714
    %v218 = vmul.f32 %v201, 14.285714
    %v219 = vld [vmem:[%s0] sm:$0xff]
    %v220 = vld [vmem:[%s0 + $0x8] sm:$0xff]
    %v221 = vld [vmem:[%s0 + $0x10] sm:$0xff]
    %v222 = vld [vmem:[%s0 + $0x18] sm:$0xff]
    %v223 = vld [vmem:[%s0 + $0x20] sm:$0xff]
    %v224 = vld [vmem:[%s0 + $0x28] sm:$0xff]
    %v225 = vld [vmem:[%s0 + $0x30] sm:$0xff]
    %v226 = vld [vmem:[%s0 + $0x38] sm:$0xff]
    %v227 = vld [vmem:[%s0 + $0x40] sm:$0xff]
    %v228 = vld [vmem:[%s0 + $0x48] sm:$0xff]
    %v229 = vld [vmem:[%s0 + $0x50] sm:$0xff]
    %v230 = vld [vmem:[%s0 + $0x58] sm:$0xff]
    %v231 = vld [vmem:[%s0 + $0x60] sm:$0xff]
    %v232 = vld [vmem:[%s0 + $0x68] sm:$0xff]
    %v233 = vld [vmem:[%s0 + $0x70] sm:$0xff]
    %v234 = vld [vmem:[%s0 + $0x78] sm:$0xff]
    %v235 = vld [vmem:[%s1] sm:$0xff]
    %v236 = vld [vmem:[%s1 + $0x8] sm:$0xff]
    %v237 = vld [vmem:[%s1 + $0x10] sm:$0xff]
    %v238 = vld [vmem:[%s1 + $0x18] sm:$0xff]
    %v239 = vld [vmem:[%s1 + $0x20] sm:$0xff]
    %v240 = vld [vmem:[%s1 + $0x28] sm:$0xff]
    %v241 = vld [vmem:[%s1 + $0x30] sm:$0xff]
    %v242 = vld [vmem:[%s1 + $0x38] sm:$0xff]
    %v243 = vld [vmem:[%s1 + $0x40] sm:$0xff]
    %v244 = vld [vmem:[%s1 + $0x48] sm:$0xff]
    %v245 = vld [vmem:[%s1 + $0x50] sm:$0xff]
    %v246 = vld [vmem:[%s1 + $0x58] sm:$0xff]
    %v247 = vld [vmem:[%s1 + $0x60] sm:$0xff]
    %v248 = vld [vmem:[%s1 + $0x68] sm:$0xff]
    %v249 = vld [vmem:[%s1 + $0x70] sm:$0xff]
    %v250 = vld [vmem:[%s1 + $0x78] sm:$0xff]
    %v251 = vld [vmem:[%s2] sm:$0x1]
    %v252 = vld [vmem:[%s3] sm:$0x1]
    %253 = vset.pattern.permute.xlu0 0
    %254 = vperm.xlu0 %253, %v219
    %v255 = vpop.permute.xlu0 %254
    %256 = vset.pattern.permute.xlu0 0
    %257 = vperm.xlu0 %256, %v220
    %v258 = vpop.permute.xlu0 %257
    %259 = vset.pattern.permute.xlu0 0
    %260 = vperm.xlu0 %259, %v221
    %v261 = vpop.permute.xlu0 %260
    %262 = vset.pattern.permute.xlu0 0
    %263 = vperm.xlu0 %262, %v222
    %v264 = vpop.permute.xlu0 %263
    %265 = vset.pattern.permute.xlu0 0
    %266 = vperm.xlu0 %265, %v223
    %v267 = vpop.permute.xlu0 %266
    %268 = vset.pattern.permute.xlu0 0
    %269 = vperm.xlu0 %268, %v224
    %v270 = vpop.permute.xlu0 %269
    %271 = vset.pattern.permute.xlu0 0
    %272 = vperm.xlu0 %271, %v225
    %v273 = vpop.permute.xlu0 %272
    %274 = vset.pattern.permute.xlu0 0
    %275 = vperm.xlu0 %274, %v226
    %v276 = vpop.permute.xlu0 %275
    %277 = vset.pattern.permute.xlu0 0
    %278 = vperm.xlu0 %277, %v227
    %v279 = vpop.permute.xlu0 %278
    %280 = vset.pattern.permute.xlu0 0
    %281 = vperm.xlu0 %280, %v228
    %v282 = vpop.permute.xlu0 %281
    %283 = vset.pattern.permute.xlu0 0
    %284 = vperm.xlu0 %283, %v229
    %v285 = vpop.permute.xlu0 %284
    %286 = vset.pattern.permute.xlu0 0
    %287 = vperm.xlu0 %286, %v230
    %v288 = vpop.permute.xlu0 %287
    %289 = vset.pattern.permute.xlu0 0
    %290 = vperm.xlu0 %289, %v231
    %v291 = vpop.permute.xlu0 %290
    %292 = vset.pattern.permute.xlu0 0
    %293 = vperm.xlu0 %292, %v232
    %v294 = vpop.permute.xlu0 %293
    %295 = vset.pattern.permute.xlu0 0
    %296 = vperm.xlu0 %295, %v233
    %v297 = vpop.permute.xlu0 %296
    %298 = vset.pattern.permute.xlu0 0
    %299 = vperm.xlu0 %298, %v234
    %v300 = vpop.permute.xlu0 %299
    %v301 = vperm.slane %v251, 0
    %vm302 = vcmp.eq.s32.totalorder %v255, %v301
    %vm303 = vcmp.eq.s32.totalorder %v258, %v301
    %vm304 = vcmp.eq.s32.totalorder %v261, %v301
    %vm305 = vcmp.eq.s32.totalorder %v264, %v301
    %vm306 = vcmp.eq.s32.totalorder %v267, %v301
    %vm307 = vcmp.eq.s32.totalorder %v270, %v301
    %vm308 = vcmp.eq.s32.totalorder %v273, %v301
    %vm309 = vcmp.eq.s32.totalorder %v276, %v301
    %vm310 = vcmp.eq.s32.totalorder %v279, %v301
    %vm311 = vcmp.eq.s32.totalorder %v282, %v301
    %vm312 = vcmp.eq.s32.totalorder %v285, %v301
    %vm313 = vcmp.eq.s32.totalorder %v288, %v301
    %vm314 = vcmp.eq.s32.totalorder %v291, %v301
    %vm315 = vcmp.eq.s32.totalorder %v294, %v301
    %vm316 = vcmp.eq.s32.totalorder %v297, %v301
    %vm317 = vcmp.eq.s32.totalorder %v300, %v301
    %318 = vset.pattern.permute.xlu0 0
    %319 = vperm.xlu0 %318, %v235
    %v320 = vpop.permute.xlu0 %319
    %321 = vset.pattern.permute.xlu0 0
    %322 = vperm.xlu0 %321, %v236
    %v323 = vpop.permute.xlu0 %322
    %324 = vset.pattern.permute.xlu0 0
    %325 = vperm.xlu0 %324, %v237
    %v326 = vpop.permute.xlu0 %325
    %327 = vset.pattern.permute.xlu0 0
    %328 = vperm.xlu0 %327, %v238
    %v329 = vpop.permute.xlu0 %328
    %330 = vset.pattern.permute.xlu0 0
    %331 = vperm.xlu0 %330, %v239
    %v332 = vpop.permute.xlu0 %331
    %333 = vset.pattern.permute.xlu0 0
    %334 = vperm.xlu0 %333, %v240
    %v335 = vpop.permute.xlu0 %334
    %336 = vset.pattern.permute.xlu0 0
    %337 = vperm.xlu0 %336, %v241
    %v338 = vpop.permute.xlu0 %337
    %339 = vset.pattern.permute.xlu0 0
    %340 = vperm.xlu0 %339, %v242
    %v341 = vpop.permute.xlu0 %340
    %342 = vset.pattern.permute.xlu0 0
    %343 = vperm.xlu0 %342, %v243
    %v344 = vpop.permute.xlu0 %343
    %345 = vset.pattern.permute.xlu0 0
    %346 = vperm.xlu0 %345, %v244
    %v347 = vpop.permute.xlu0 %346
    %348 = vset.pattern.permute.xlu0 0
    %349 = vperm.xlu0 %348, %v245
    %v350 = vpop.permute.xlu0 %349
    %351 = vset.pattern.permute.xlu0 0
    %352 = vperm.xlu0 %351, %v246
    %v353 = vpop.permute.xlu0 %352
    %354 = vset.pattern.permute.xlu0 0
    %355 = vperm.xlu0 %354, %v247
    %v356 = vpop.permute.xlu0 %355
    %357 = vset.pattern.permute.xlu0 0
    %358 = vperm.xlu0 %357, %v248
    %v359 = vpop.permute.xlu0 %358
    %360 = vset.pattern.permute.xlu0 0
    %361 = vperm.xlu0 %360, %v249
    %v362 = vpop.permute.xlu0 %361
    %363 = vset.pattern.permute.xlu0 0
    %364 = vperm.xlu0 %363, %v250
    %v365 = vpop.permute.xlu0 %364
    %v366 = vperm.slane %v252, 0
    %vm367 = vcmp.eq.s32.totalorder %v320, %v366
    %vm368 = vcmp.eq.s32.totalorder %v323, %v366
    %vm369 = vcmp.eq.s32.totalorder %v326, %v366
    %vm370 = vcmp.eq.s32.totalorder %v329, %v366
    %vm371 = vcmp.eq.s32.totalorder %v332, %v366
    %vm372 = vcmp.eq.s32.totalorder %v335, %v366
    %vm373 = vcmp.eq.s32.totalorder %v338, %v366
    %vm374 = vcmp.eq.s32.totalorder %v341, %v366
    %vm375 = vcmp.eq.s32.totalorder %v344, %v366
    %vm376 = vcmp.eq.s32.totalorder %v347, %v366
    %vm377 = vcmp.eq.s32.totalorder %v350, %v366
    %vm378 = vcmp.eq.s32.totalorder %v353, %v366
    %vm379 = vcmp.eq.s32.totalorder %v356, %v366
    %vm380 = vcmp.eq.s32.totalorder %v359, %v366
    %vm381 = vcmp.eq.s32.totalorder %v362, %v366
    %vm382 = vcmp.eq.s32.totalorder %v365, %v366
    %vm383 = vmxor %vm367, 1
    %vm384 = vmxor %vm368, 1
    %vm385 = vmxor %vm369, 1
    %vm386 = vmxor %vm370, 1
    %vm387 = vmxor %vm371, 1
    %vm388 = vmxor %vm372, 1
    %vm389 = vmxor %vm373, 1
    %vm390 = vmxor %vm374, 1
    %vm391 = vmxor %vm375, 1
    %vm392 = vmxor %vm376, 1
    %vm393 = vmxor %vm377, 1
    %vm394 = vmxor %vm378, 1
    %vm395 = vmxor %vm379, 1
    %vm396 = vmxor %vm380, 1
    %vm397 = vmxor %vm381, 1
    %vm398 = vmxor %vm382, 1
    %vm399 = vmand %vm302, %vm383
    %vm400 = vmand %vm303, %vm384
    %vm401 = vmand %vm304, %vm385
    %vm402 = vmand %vm305, %vm386
    %vm403 = vmand %vm306, %vm387
    %vm404 = vmand %vm307, %vm388
    %vm405 = vmand %vm308, %vm389
    %vm406 = vmand %vm309, %vm390
    %vm407 = vmand %vm310, %vm391
    %vm408 = vmand %vm311, %vm392
    %vm409 = vmand %vm312, %vm393
    %vm410 = vmand %vm313, %vm394
    %vm411 = vmand %vm314, %vm395
    %vm412 = vmand %vm315, %vm396
    %vm413 = vmand %vm316, %vm397
    %vm414 = vmand %vm317, %vm398
    %vm415 = vmxor %vm302, 1
    %vm416 = vmxor %vm303, 1
    %vm417 = vmxor %vm304, 1
    %vm418 = vmxor %vm305, 1
    %vm419 = vmxor %vm306, 1
    %vm420 = vmxor %vm307, 1
    %vm421 = vmxor %vm308, 1
    %vm422 = vmxor %vm309, 1
    %vm423 = vmxor %vm310, 1
    %vm424 = vmxor %vm311, 1
    %vm425 = vmxor %vm312, 1
    %vm426 = vmxor %vm313, 1
    %vm427 = vmxor %vm314, 1
    %vm428 = vmxor %vm315, 1
    %vm429 = vmxor %vm316, 1
    %vm430 = vmxor %vm317, 1
    %vm431 = vcmp.lt.s32.totalorder %v235, 16
    %vm432 = vcmp.lt.s32.totalorder %v236, 16
    %vm433 = vcmp.lt.s32.totalorder %v237, 16
    %vm434 = vcmp.lt.s32.totalorder %v238, 16
    %vm435 = vcmp.lt.s32.totalorder %v239, 16
    %vm436 = vcmp.lt.s32.totalorder %v240, 16
    %vm437 = vcmp.lt.s32.totalorder %v241, 16
    %vm438 = vcmp.lt.s32.totalorder %v242, 16
    %vm439 = vcmp.lt.s32.totalorder %v243, 16
    %vm440 = vcmp.lt.s32.totalorder %v244, 16
    %vm441 = vcmp.lt.s32.totalorder %v245, 16
    %vm442 = vcmp.lt.s32.totalorder %v246, 16
    %vm443 = vcmp.lt.s32.totalorder %v247, 16
    %vm444 = vcmp.lt.s32.totalorder %v248, 16
    %vm445 = vcmp.lt.s32.totalorder %v249, 16
    %vm446 = vcmp.lt.s32.totalorder %v250, 16
    %v447 = vsel %vm431, 1, 0
    %v448 = vsel %vm432, 1, 0
    %v449 = vsel %vm433, 1, 0
    %v450 = vsel %vm434, 1, 0
    %v451 = vsel %vm435, 1, 0
    %v452 = vsel %vm436, 1, 0
    %v453 = vsel %vm437, 1, 0
    %v454 = vsel %vm438, 1, 0
    %v455 = vsel %vm439, 1, 0
    %v456 = vsel %vm440, 1, 0
    %v457 = vsel %vm441, 1, 0
    %v458 = vsel %vm442, 1, 0
    %v459 = vsel %vm443, 1, 0
    %v460 = vsel %vm444, 1, 0
    %v461 = vsel %vm445, 1, 0
    %v462 = vsel %vm446, 1, 0
    %463 = vset.pattern.permute.xlu0 0
    %464 = vperm.xlu0 %463, %v447
    %v465 = vpop.permute.xlu0 %464
    %466 = vset.pattern.permute.xlu0 0
    %467 = vperm.xlu0 %466, %v448
    %v468 = vpop.permute.xlu0 %467
    %469 = vset.pattern.permute.xlu0 0
    %470 = vperm.xlu0 %469, %v449
    %v471 = vpop.permute.xlu0 %470
    %472 = vset.pattern.permute.xlu0 0
    %473 = vperm.xlu0 %472, %v450
    %v474 = vpop.permute.xlu0 %473
    %475 = vset.pattern.permute.xlu0 0
    %476 = vperm.xlu0 %475, %v451
    %v477 = vpop.permute.xlu0 %476
    %478 = vset.pattern.permute.xlu0 0
    %479 = vperm.xlu0 %478, %v452
    %v480 = vpop.permute.xlu0 %479
    %481 = vset.pattern.permute.xlu0 0
    %482 = vperm.xlu0 %481, %v453
    %v483 = vpop.permute.xlu0 %482
    %484 = vset.pattern.permute.xlu0 0
    %485 = vperm.xlu0 %484, %v454
    %v486 = vpop.permute.xlu0 %485
    %487 = vset.pattern.permute.xlu0 0
    %488 = vperm.xlu0 %487, %v455
    %v489 = vpop.permute.xlu0 %488
    %490 = vset.pattern.permute.xlu0 0
    %491 = vperm.xlu0 %490, %v456
    %v492 = vpop.permute.xlu0 %491
    %493 = vset.pattern.permute.xlu0 0
    %494 = vperm.xlu0 %493, %v457
    %v495 = vpop.permute.xlu0 %494
    %496 = vset.pattern.permute.xlu0 0
    %497 = vperm.xlu0 %496, %v458
    %v498 = vpop.permute.xlu0 %497
    %499 = vset.pattern.permute.xlu0 0
    %500 = vperm.xlu0 %499, %v459
    %v501 = vpop.permute.xlu0 %500
    %502 = vset.pattern.permute.xlu0 0
    %503 = vperm.xlu0 %502, %v460
    %v504 = vpop.permute.xlu0 %503
    %505 = vset.pattern.permute.xlu0 0
    %506 = vperm.xlu0 %505, %v461
    %v507 = vpop.permute.xlu0 %506
    %508 = vset.pattern.permute.xlu0 0
    %509 = vperm.xlu0 %508, %v462
    %v510 = vpop.permute.xlu0 %509
    %vm511 = vcmp.eq.s32.totalorder %v465, 1
    %vm512 = vcmp.eq.s32.totalorder %v468, 1
    %vm513 = vcmp.eq.s32.totalorder %v471, 1
    %vm514 = vcmp.eq.s32.totalorder %v474, 1
    %vm515 = vcmp.eq.s32.totalorder %v477, 1
    %vm516 = vcmp.eq.s32.totalorder %v480, 1
    %vm517 = vcmp.eq.s32.totalorder %v483, 1
    %vm518 = vcmp.eq.s32.totalorder %v486, 1
    %vm519 = vcmp.eq.s32.totalorder %v489, 1
    %vm520 = vcmp.eq.s32.totalorder %v492, 1
    %vm521 = vcmp.eq.s32.totalorder %v495, 1
    %vm522 = vcmp.eq.s32.totalorder %v498, 1
    %vm523 = vcmp.eq.s32.totalorder %v501, 1
    %vm524 = vcmp.eq.s32.totalorder %v504, 1
    %vm525 = vcmp.eq.s32.totalorder %v507, 1
    %vm526 = vcmp.eq.s32.totalorder %v510, 1
    %vm527 = vmand %vm415, %vm511
    %vm528 = vmand %vm416, %vm512
    %vm529 = vmand %vm417, %vm513
    %vm530 = vmand %vm418, %vm514
    %vm531 = vmand %vm419, %vm515
    %vm532 = vmand %vm420, %vm516
    %vm533 = vmand %vm421, %vm517
    %vm534 = vmand %vm422, %vm518
    %vm535 = vmand %vm423, %vm519
    %vm536 = vmand %vm424, %vm520
    %vm537 = vmand %vm425, %vm521
    %vm538 = vmand %vm426, %vm522
    %vm539 = vmand %vm427, %vm523
    %vm540 = vmand %vm428, %vm524
    %vm541 = vmand %vm429, %vm525
    %vm542 = vmand %vm430, %vm526
    %v543 = vsel %vm511, %v203, -1e+30
    %v544 = vsel %vm512, %v204, -1e+30
    %v545 = vsel %vm513, %v205, -1e+30
    %v546 = vsel %vm514, %v206, -1e+30
    %v547 = vsel %vm515, %v207, -1e+30
    %v548 = vsel %vm516, %v208, -1e+30
    %v549 = vsel %vm517, %v209, -1e+30
    %v550 = vsel %vm518, %v210, -1e+30
    %v551 = vsel %vm519, %v211, -1e+30
    %v552 = vsel %vm520, %v212, -1e+30
    %v553 = vsel %vm521, %v213, -1e+30
    %v554 = vsel %vm522, %v214, -1e+30
    %v555 = vsel %vm523, %v215, -1e+30
    %v556 = vsel %vm524, %v216, -1e+30
    %v557 = vsel %vm525, %v217, -1e+30
    %v558 = vsel %vm526, %v218, -1e+30
    %v559 = vmax.f32 %v543, %v547
    %v560 = vmax.f32 %v544, %v548
    %v561 = vmax.f32 %v545, %v549
    %v562 = vmax.f32 %v546, %v550
    %v563 = vmax.f32 %v559, %v551
    %v564 = vmax.f32 %v560, %v552
    %v565 = vmax.f32 %v561, %v553
    %v566 = vmax.f32 %v562, %v554
    %v567 = vmax.f32 %v563, %v555
    %v568 = vmax.f32 %v564, %v556
    %v569 = vmax.f32 %v565, %v557
    %v570 = vmax.f32 %v566, %v558
    %v571 = vmax.f32 %v567, %v568
    %v572 = vmax.f32 %v569, %v570
    %v573 = vmax.f32 %v571, %v572
    %v574 = vrot.slane %v573, 4
    %v575 = vmax.f32 %v573, %v574
    %v576 = vrot.slane %v575, 2
    %v577 = vmax.f32 %v575, %v576
    %v578 = vrot.slane %v577, 1
    %v579 = vmax.f32 %v577, %v578
    %v580 = vsub.f32 %v203, %v579
    %v581 = vsub.f32 %v204, %v579
    %v582 = vsub.f32 %v205, %v579
    %v583 = vsub.f32 %v206, %v579
    %v584 = vsub.f32 %v207, %v579
    %v585 = vsub.f32 %v208, %v579
    %v586 = vsub.f32 %v209, %v579
    %v587 = vsub.f32 %v210, %v579
    %v588 = vsub.f32 %v211, %v579
    %v589 = vsub.f32 %v212, %v579
    %v590 = vsub.f32 %v213, %v579
    %v591 = vsub.f32 %v214, %v579
    %v592 = vsub.f32 %v215, %v579
    %v593 = vsub.f32 %v216, %v579
    %v594 = vsub.f32 %v217, %v579
    %v595 = vsub.f32 %v218, %v579
    %v596 = vmul.f32 %v580, 1.442695
    %v597 = vpow.pop %v596
    %v598 = vmul.f32 %v581, 1.442695
    %v599 = vpow.pop %v598
    %v600 = vmul.f32 %v582, 1.442695
    %v601 = vpow.pop %v600
    %v602 = vmul.f32 %v583, 1.442695
    %v603 = vpow.pop %v602
    %v604 = vmul.f32 %v584, 1.442695
    %v605 = vpow.pop %v604
    %v606 = vmul.f32 %v585, 1.442695
    %v607 = vpow.pop %v606
    %v608 = vmul.f32 %v586, 1.442695
    %v609 = vpow.pop %v608
    %v610 = vmul.f32 %v587, 1.442695
    %v611 = vpow.pop %v610
    %v612 = vmul.f32 %v588, 1.442695
    %v613 = vpow.pop %v612
    %v614 = vmul.f32 %v589, 1.442695
    %v615 = vpow.pop %v614
    %v616 = vmul.f32 %v590, 1.442695
    %v617 = vpow.pop %v616
    %v618 = vmul.f32 %v591, 1.442695
    %v619 = vpow.pop %v618
    %v620 = vmul.f32 %v592, 1.442695
    %v621 = vpow.pop %v620
    %v622 = vmul.f32 %v593, 1.442695
    %v623 = vpow.pop %v622
    %v624 = vmul.f32 %v594, 1.442695
    %v625 = vpow.pop %v624
    %v626 = vmul.f32 %v595, 1.442695
    %v627 = vpow.pop %v626
    %v628 = vsel %vm527, %v597, 0.0
    %v629 = vsel %vm528, %v599, 0.0
    %v630 = vsel %vm529, %v601, 0.0
    %v631 = vsel %vm530, %v603, 0.0
    %v632 = vsel %vm531, %v605, 0.0
    %v633 = vsel %vm532, %v607, 0.0
    %v634 = vsel %vm533, %v609, 0.0
    %v635 = vsel %vm534, %v611, 0.0
    %v636 = vsel %vm535, %v613, 0.0
    %v637 = vsel %vm536, %v615, 0.0
    %v638 = vsel %vm537, %v617, 0.0
    %v639 = vsel %vm538, %v619, 0.0
    %v640 = vsel %vm539, %v621, 0.0
    %v641 = vsel %vm540, %v623, 0.0
    %v642 = vsel %vm541, %v625, 0.0
    %v643 = vsel %vm542, %v627, 0.0
    %v644 = vadd.f32 %v628, %v629
    %v645 = vadd.f32 %v644, %v630
    %v646 = vadd.f32 %v645, %v631
    %v647 = vadd.f32 %v646, %v632
    %v648 = vadd.f32 %v647, %v633
    %v649 = vadd.f32 %v648, %v634
    %v650 = vadd.f32 %v649, %v635
    %v651 = vadd.f32 %v650, %v636
    %v652 = vadd.f32 %v651, %v637
    %v653 = vadd.f32 %v652, %v638
    %v654 = vadd.f32 %v653, %v639
    %v655 = vadd.f32 %v654, %v640
    %v656 = vadd.f32 %v655, %v641
    %v657 = vadd.f32 %v656, %v642
    %v658 = vadd.f32 %v657, %v643
    %v659 = vrot.slane %v658, 4
    %v660 = vadd.f32 %v658, %v659
    %v661 = vrot.slane %v660, 2
    %v662 = vadd.f32 %v660, %v661
    %v663 = vrot.slane %v662, 1
    %v664 = vadd.f32 %v662, %v663
    %v665 = vlog2.pop %v664
    %v666 = vmul.f32 %v665, 0.6931472
    %v667 = vsel %vm399, %v580, 0.0
    %v668 = vsel %vm400, %v581, 0.0
    %v669 = vsel %vm401, %v582, 0.0
    %v670 = vsel %vm402, %v583, 0.0
    %v671 = vsel %vm403, %v584, 0.0
    %v672 = vsel %vm404, %v585, 0.0
    %v673 = vsel %vm405, %v586, 0.0
    %v674 = vsel %vm406, %v587, 0.0
    %v675 = vsel %vm407, %v588, 0.0
    %v676 = vsel %vm408, %v589, 0.0
    %v677 = vsel %vm409, %v590, 0.0
    %v678 = vsel %vm410, %v591, 0.0
    %v679 = vsel %vm411, %v592, 0.0
    %v680 = vsel %vm412, %v593, 0.0
    %v681 = vsel %vm413, %v594, 0.0
    %v682 = vsel %vm414, %v595, 0.0
    %v683 = vadd.f32 %v667, %v668
    %v684 = vadd.f32 %v683, %v669
    %v685 = vadd.f32 %v684, %v670
    %v686 = vadd.f32 %v685, %v671
    %v687 = vadd.f32 %v686, %v672
    %v688 = vadd.f32 %v687, %v673
    %v689 = vadd.f32 %v688, %v674
    %v690 = vadd.f32 %v689, %v675
    %v691 = vadd.f32 %v690, %v676
    %v692 = vadd.f32 %v691, %v677
    %v693 = vadd.f32 %v692, %v678
    %v694 = vadd.f32 %v693, %v679
    %v695 = vadd.f32 %v694, %v680
    %v696 = vadd.f32 %v695, %v681
    %v697 = vadd.f32 %v696, %v682
    %v698 = vrot.slane %v697, 4
    %v699 = vadd.f32 %v697, %v698
    %v700 = vrot.slane %v699, 2
    %v701 = vadd.f32 %v699, %v700
    %v702 = vrot.slane %v701, 1
    %v703 = vadd.f32 %v701, %v702
    %v704 = vsub.f32 %v703, %v666
    %v705 = vmul.f32 %v704, -1.0
    %vm706 = vcmp.lt.s32.totalorder %v252, 16
    %v707 = vsel %vm706, %v705, 0.0
    %708 = vst [vmem:[#allocation2] sm:$0x1] %v707
    // Predicated region
    $region22: #{tpu_custom_call.1} parent=1 // pred_check
      _
    $region23: #{tpu_custom_call.1} parent=1 // pred_check_branch
      %710 = sbr.rel (0) target = $region25
    $region24: #{tpu_custom_call.1} parent=1 // pred_region
      %712 = vsyncadd [#allocation3], 0
      %s714 = sshll.u32 [#allocation2], 4
      %s715 = int_to_ptr.vmem [resolvable:$true] %s714
      %s716 = sshll.u32 %s5, 4
      %s717 = int_to_ptr.hbm [resolvable:$true] %s716
      %719 = dma.vmem_to_hbm [thread:$0]  %s715, 16, %s717, [#allocation3]
    $region25: #{tpu_custom_call.1} parent=1 // pred_fallthru
      _
    // Predicated region
    $region26: #{tpu_custom_call.1} parent=1 // pred_check
      _
    $region27: #{tpu_custom_call.1} parent=1 // pred_check_branch
      %721 = sbr.rel (0) target = $region29
    $region28: #{tpu_custom_call.1} parent=1 // pred_region
      %723 = dma.done [#allocation3], 16
    $region29: #{tpu_custom_call.1} parent=1 // pred_fallthru
      _
    %724 = vsyncpa [#allocation3], 1

// kernel: tpu_custom_call.1
$region0: #{tpu_custom_call.1}
  #allocation0 [shape = 'u32[]', space=smem, size = 0x4, offset = 0x4, fixed_abs, tag = 'smem constant byte address 0x4 - core index']
  #allocation1 [shape = 'u32[72,128]{1,0:T(1,128)}', space=vmem, size = 0x9000, scoped, tag = 'internal scratch']
  %s0 = inlined_call_operand.vmem [shape: s32[128,1], index: 0, kind: input, shape index: {}]
  %s1 = inlined_call_operand.vmem [shape: s32[128,1], index: 1, kind: input, shape index: {}]
  %s2 = inlined_call_operand.vmem [shape: s32[1,128], index: 2, kind: input, shape index: {}]
  %s3 = inlined_call_operand.vmem [shape: s32[1,128], index: 3, kind: input, shape index: {}]
  %s4 = inlined_call_operand.vmem [shape: bf16[128,128], index: 4, kind: input, shape index: {}]
  %s5 = inlined_call_operand.hbm [shape: f32[1,128], index: 5, kind: output, shape index: {}]
  %s6 = sld [smem:[#allocation0]]
  $region30: #{tpu_custom_call.1} parent=0
    _
  %s8 = ssub.s32 1, %s6
  %s9 = scalar_select 0, %s8, %s6
  $region1: #{tpu_custom_call.1} parent=0
    #allocation2 [shape = 'u8[512]{0}', space=vmem, size = 0x400, scoped, tag = 'output window, operand 0, single buffered']
    #allocation3 [shape = 's32[1]{0}', space=sflag, size = 0x4, scoped, tag = 'scoped memory for tpu_custom_call.1']
    %10 = vsyncpa [#allocation3], 0
    // Predicated region
    $region2: #{tpu_custom_call.1} parent=1 // pred_check
      _
    $region3: #{tpu_custom_call.1} parent=1 // pred_check_branch
      %12 = sbr.rel (0) target = $region5
    $region4: #{tpu_custom_call.1} parent=1 // pred_region
      _
    $region5: #{tpu_custom_call.1} parent=1 // pred_fallthru
      _
    // Predicated region
    $region6: #{tpu_custom_call.1} parent=1 // pred_check
      _
    $region7: #{tpu_custom_call.1} parent=1 // pred_check_branch
      %14 = sbr.rel (0) target = $region9
    $region8: #{tpu_custom_call.1} parent=1 // pred_region
      _
    $region9: #{tpu_custom_call.1} parent=1 // pred_fallthru
      _
    // Predicated region
    $region10: #{tpu_custom_call.1} parent=1 // pred_check
      _
    $region11: #{tpu_custom_call.1} parent=1 // pred_check_branch
      %16 = sbr.rel (0) target = $region13
    $region12: #{tpu_custom_call.1} parent=1 // pred_region
      _
    $region13: #{tpu_custom_call.1} parent=1 // pred_fallthru
      _
    // Predicated region
    $region14: #{tpu_custom_call.1} parent=1 // pred_check
      _
    $region15: #{tpu_custom_call.1} parent=1 // pred_check_branch
      %18 = sbr.rel (0) target = $region17
    $region16: #{tpu_custom_call.1} parent=1 // pred_region
      _
    $region17: #{tpu_custom_call.1} parent=1 // pred_fallthru
      _
    // Predicated region
    $region18: #{tpu_custom_call.1} parent=1 // pred_check
      _
    $region19: #{tpu_custom_call.1} parent=1 // pred_check_branch
      %20 = sbr.rel (0) target = $region21
    $region20: #{tpu_custom_call.1} parent=1 // pred_region
      _
    $region21: #{tpu_custom_call.1} parent=1 // pred_fallthru
      _
    %s21 = smul.u32 0, 128
    %v22 = vld [vmem:[%s4] sm:$0xf]
    %v23 = vld [vmem:[%s4 + $0x4] sm:$0xf]
    %v24 = vld [vmem:[%s4 + $0x8] sm:$0xf]
    %v25 = vld [vmem:[%s4 + $0xc] sm:$0xf]
    %v26 = vld [vmem:[%s4 + $0x10] sm:$0xf]
    %v27 = vld [vmem:[%s4 + $0x14] sm:$0xf]
    %v28 = vld [vmem:[%s4 + $0x18] sm:$0xf]
    %v29 = vld [vmem:[%s4 + $0x1c] sm:$0xf]
    %v30 = vld [vmem:[%s4 + $0x20] sm:$0xf]
    %v31 = vld [vmem:[%s4 + $0x24] sm:$0xf]
    %v32 = vld [vmem:[%s4 + $0x28] sm:$0xf]
    %v33 = vld [vmem:[%s4 + $0x2c] sm:$0xf]
    %v34 = vld [vmem:[%s4 + $0x30] sm:$0xf]
    %v35 = vld [vmem:[%s4 + $0x34] sm:$0xf]
    %v36 = vld [vmem:[%s4 + $0x38] sm:$0xf]
    %v37 = vld [vmem:[%s4 + $0x3c] sm:$0xf]
    %s38 = sshra.s32 %s21, 3
    %s39 = sand.u32 %s21, 7
    %s40 = smul.addr %s38, 4
    %s41 = scalar_lea.vmem %s4, %s40
    %v42 = vld [vmem:[%s41] sm:$0xf]
    %v43 = vld [vmem:[%s41 + $0x4] sm:$0xf]
    %v44 = vld [vmem:[%s41 + $0x8] sm:$0xf]
    %v45 = vld [vmem:[%s41 + $0xc] sm:$0xf]
    %v46 = vld [vmem:[%s41 + $0x10] sm:$0xf]
    %v47 = vld [vmem:[%s41 + $0x14] sm:$0xf]
    %v48 = vld [vmem:[%s41 + $0x18] sm:$0xf]
    %v49 = vld [vmem:[%s41 + $0x1c] sm:$0xf]
    %v50 = vld [vmem:[%s41 + $0x20] sm:$0xf]
    %v51 = vld [vmem:[%s41 + $0x24] sm:$0xf]
    %v52 = vld [vmem:[%s41 + $0x28] sm:$0xf]
    %v53 = vld [vmem:[%s41 + $0x2c] sm:$0xf]
    %v54 = vld [vmem:[%s41 + $0x30] sm:$0xf]
    %v55 = vld [vmem:[%s41 + $0x34] sm:$0xf]
    %v56 = vld [vmem:[%s41 + $0x38] sm:$0xf]
    %v57 = vld [vmem:[%s41 + $0x3c] sm:$0xf]
    %v74 = vunpack.c.l.b16 %v22
    %v75 = vunpack.c.l.b16 %v23
    %v76 = vunpack.c.l.b16 %v24
    %v77 = vunpack.c.l.b16 %v25
    %v78 = vunpack.c.l.b16 %v26
    %v79 = vunpack.c.l.b16 %v27
    %v80 = vunpack.c.l.b16 %v28
    %v81 = vunpack.c.l.b16 %v29
    %v82 = vunpack.c.l.b16 %v30
    %v83 = vunpack.c.l.b16 %v31
    %v84 = vunpack.c.l.b16 %v32
    %v85 = vunpack.c.l.b16 %v33
    %v86 = vunpack.c.l.b16 %v34
    %v87 = vunpack.c.l.b16 %v35
    %v88 = vunpack.c.l.b16 %v36
    %v89 = vunpack.c.l.b16 %v37
    %v90 = vpack.c.b16 %v75, %v74
    %v91 = vpack.c.b16 %v77, %v76
    %v92 = vpack.c.b16 %v79, %v78
    %v93 = vpack.c.b16 %v81, %v80
    %v94 = vpack.c.b16 %v83, %v82
    %v95 = vpack.c.b16 %v85, %v84
    %v96 = vpack.c.b16 %v87, %v86
    %v97 = vpack.c.b16 %v89, %v88
    %v122 = vunpack.c.l.b16 %v42
    %v123 = vunpack.c.l.b16 %v43
    %v124 = vunpack.c.l.b16 %v44
    %v125 = vunpack.c.l.b16 %v45
    %v126 = vunpack.c.l.b16 %v46
    %v127 = vunpack.c.l.b16 %v47
    %v128 = vunpack.c.l.b16 %v48
    %v129 = vunpack.c.l.b16 %v49
    %v130 = vunpack.c.l.b16 %v50
    %v131 = vunpack.c.l.b16 %v51
    %v132 = vunpack.c.l.b16 %v52
    %v133 = vunpack.c.l.b16 %v53
    %v134 = vunpack.c.l.b16 %v54
    %v135 = vunpack.c.l.b16 %v55
    %v136 = vunpack.c.l.b16 %v56
    %v137 = vunpack.c.l.b16 %v57
    %v138 = vpack.c.b16 %v123, %v122
    %v139 = vpack.c.b16 %v125, %v124
    %v140 = vpack.c.b16 %v127, %v126
    %v141 = vpack.c.b16 %v129, %v128
    %v142 = vpack.c.b16 %v131, %v130
    %v143 = vpack.c.b16 %v133, %v132
    %v144 = vpack.c.b16 %v135, %v134
    %v145 = vpack.c.b16 %v137, %v136
    %154 = vmatpush.bf16.xpose.msra.mxu0 %v145
    %155 = vmatpush.bf16.xpose.msra.mxu0 %v144
    %156 = vmatpush.bf16.xpose.msra.mxu0 %v143
    %157 = vmatpush.bf16.xpose.msra.mxu0 %v142
    %158 = vmatpush.bf16.xpose.msra.mxu0 %v141
    %159 = vmatpush.bf16.xpose.msra.mxu0 %v140
    %160 = vmatpush.bf16.xpose.msra.mxu0 %v139
    %161 = vmatpush.bf16.xpose.msra.mxu0 %v138
    %162 = vmatmul.bf16.gmra.mxu0 %v90
    %v163 = vpop.f32.mrf.mxu0
    %v164 = vadd.f32 0.0, %v163
    %v165 = vpop.f32.mrf.mxu0
    %v166 = vadd.f32 0.0, %v165
    %167 = vmatmul.bf16.gmra.mxu0 %v91
    %v168 = vpop.f32.mrf.mxu0
    %v169 = vadd.f32 0.0, %v168
    %v170 = vpop.f32.mrf.mxu0
    %v171 = vadd.f32 0.0, %v170
    %172 = vmatmul.bf16.gmra.mxu0 %v92
    %v173 = vpop.f32.mrf.mxu0
    %v174 = vadd.f32 0.0, %v173
    %v175 = vpop.f32.mrf.mxu0
    %v176 = vadd.f32 0.0, %v175
    %177 = vmatmul.bf16.gmra.mxu0 %v93
    %v178 = vpop.f32.mrf.mxu0
    %v179 = vadd.f32 0.0, %v178
    %v180 = vpop.f32.mrf.mxu0
    %v181 = vadd.f32 0.0, %v180
    %182 = vmatmul.bf16.gmra.mxu0 %v94
    %v183 = vpop.f32.mrf.mxu0
    %v184 = vadd.f32 0.0, %v183
    %v185 = vpop.f32.mrf.mxu0
    %v186 = vadd.f32 0.0, %v185
    %187 = vmatmul.bf16.gmra.mxu0 %v95
    %v188 = vpop.f32.mrf.mxu0
    %v189 = vadd.f32 0.0, %v188
    %v190 = vpop.f32.mrf.mxu0
    %v191 = vadd.f32 0.0, %v190
    %192 = vmatmul.bf16.gmra.mxu0 %v96
    %v193 = vpop.f32.mrf.mxu0
    %v194 = vadd.f32 0.0, %v193
    %v195 = vpop.f32.mrf.mxu0
    %v196 = vadd.f32 0.0, %v195
    %197 = vmatmul.bf16.gmra.mxu0 %v97
    %v198 = vpop.f32.mrf.mxu0
    %v199 = vadd.f32 0.0, %v198
    %v200 = vpop.f32.mrf.mxu0
    %v201 = vadd.f32 0.0, %v200
    %202 = vdwg.mxu0
    %v203 = vmul.f32 %v164, 14.285714
    %v204 = vmul.f32 %v166, 14.285714
    %v205 = vmul.f32 %v169, 14.285714
    %v206 = vmul.f32 %v171, 14.285714
    %v207 = vmul.f32 %v174, 14.285714
    %v208 = vmul.f32 %v176, 14.285714
    %v209 = vmul.f32 %v179, 14.285714
    %v210 = vmul.f32 %v181, 14.285714
    %v211 = vmul.f32 %v184, 14.285714
    %v212 = vmul.f32 %v186, 14.285714
    %v213 = vmul.f32 %v189, 14.285714
    %v214 = vmul.f32 %v191, 14.285714
    %v215 = vmul.f32 %v194, 14.285714
    %v216 = vmul.f32 %v196, 14.285714
    %v217 = vmul.f32 %v199, 14.285714
    %v218 = vmul.f32 %v201, 14.285714
    %v219 = vld [vmem:[%s0] sm:$0xff]
    %v220 = vld [vmem:[%s0 + $0x8] sm:$0xff]
    %v221 = vld [vmem:[%s0 + $0x10] sm:$0xff]
    %v222 = vld [vmem:[%s0 + $0x18] sm:$0xff]
    %v223 = vld [vmem:[%s0 + $0x20] sm:$0xff]
    %v224 = vld [vmem:[%s0 + $0x28] sm:$0xff]
    %v225 = vld [vmem:[%s0 + $0x30] sm:$0xff]
    %v226 = vld [vmem:[%s0 + $0x38] sm:$0xff]
    %v227 = vld [vmem:[%s0 + $0x40] sm:$0xff]
    %v228 = vld [vmem:[%s0 + $0x48] sm:$0xff]
    %v229 = vld [vmem:[%s0 + $0x50] sm:$0xff]
    %v230 = vld [vmem:[%s0 + $0x58] sm:$0xff]
    %v231 = vld [vmem:[%s0 + $0x60] sm:$0xff]
    %v232 = vld [vmem:[%s0 + $0x68] sm:$0xff]
    %v233 = vld [vmem:[%s0 + $0x70] sm:$0xff]
    %v234 = vld [vmem:[%s0 + $0x78] sm:$0xff]
    %v235 = vld [vmem:[%s1] sm:$0xff]
    %v236 = vld [vmem:[%s1 + $0x8] sm:$0xff]
    %v237 = vld [vmem:[%s1 + $0x10] sm:$0xff]
    %v238 = vld [vmem:[%s1 + $0x18] sm:$0xff]
    %v239 = vld [vmem:[%s1 + $0x20] sm:$0xff]
    %v240 = vld [vmem:[%s1 + $0x28] sm:$0xff]
    %v241 = vld [vmem:[%s1 + $0x30] sm:$0xff]
    %v242 = vld [vmem:[%s1 + $0x38] sm:$0xff]
    %v243 = vld [vmem:[%s1 + $0x40] sm:$0xff]
    %v244 = vld [vmem:[%s1 + $0x48] sm:$0xff]
    %v245 = vld [vmem:[%s1 + $0x50] sm:$0xff]
    %v246 = vld [vmem:[%s1 + $0x58] sm:$0xff]
    %v247 = vld [vmem:[%s1 + $0x60] sm:$0xff]
    %v248 = vld [vmem:[%s1 + $0x68] sm:$0xff]
    %v249 = vld [vmem:[%s1 + $0x70] sm:$0xff]
    %v250 = vld [vmem:[%s1 + $0x78] sm:$0xff]
    %v251 = vld [vmem:[%s2] sm:$0x1]
    %v252 = vld [vmem:[%s3] sm:$0x1]
    %253 = vset.pattern.permute.xlu0 0
    %254 = vperm.xlu0 %253, %v219
    %v255 = vpop.permute.xlu0 %254
    %256 = vset.pattern.permute.xlu0 0
    %257 = vperm.xlu0 %256, %v220
    %v258 = vpop.permute.xlu0 %257
    %259 = vset.pattern.permute.xlu0 0
    %260 = vperm.xlu0 %259, %v221
    %v261 = vpop.permute.xlu0 %260
    %262 = vset.pattern.permute.xlu0 0
    %263 = vperm.xlu0 %262, %v222
    %v264 = vpop.permute.xlu0 %263
    %265 = vset.pattern.permute.xlu0 0
    %266 = vperm.xlu0 %265, %v223
    %v267 = vpop.permute.xlu0 %266
    %268 = vset.pattern.permute.xlu0 0
    %269 = vperm.xlu0 %268, %v224
    %v270 = vpop.permute.xlu0 %269
    %271 = vset.pattern.permute.xlu0 0
    %272 = vperm.xlu0 %271, %v225
    %v273 = vpop.permute.xlu0 %272
    %274 = vset.pattern.permute.xlu0 0
    %275 = vperm.xlu0 %274, %v226
    %v276 = vpop.permute.xlu0 %275
    %277 = vset.pattern.permute.xlu0 0
    %278 = vperm.xlu0 %277, %v227
    %v279 = vpop.permute.xlu0 %278
    %280 = vset.pattern.permute.xlu0 0
    %281 = vperm.xlu0 %280, %v228
    %v282 = vpop.permute.xlu0 %281
    %283 = vset.pattern.permute.xlu0 0
    %284 = vperm.xlu0 %283, %v229
    %v285 = vpop.permute.xlu0 %284
    %286 = vset.pattern.permute.xlu0 0
    %287 = vperm.xlu0 %286, %v230
    %v288 = vpop.permute.xlu0 %287
    %289 = vset.pattern.permute.xlu0 0
    %290 = vperm.xlu0 %289, %v231
    %v291 = vpop.permute.xlu0 %290
    %292 = vset.pattern.permute.xlu0 0
    %293 = vperm.xlu0 %292, %v232
    %v294 = vpop.permute.xlu0 %293
    %295 = vset.pattern.permute.xlu0 0
    %296 = vperm.xlu0 %295, %v233
    %v297 = vpop.permute.xlu0 %296
    %298 = vset.pattern.permute.xlu0 0
    %299 = vperm.xlu0 %298, %v234
    %v300 = vpop.permute.xlu0 %299
    %v301 = vperm.slane %v251, 0
    %vm302 = vcmp.eq.s32.totalorder %v255, %v301
    %vm303 = vcmp.eq.s32.totalorder %v258, %v301
    %vm304 = vcmp.eq.s32.totalorder %v261, %v301
    %vm305 = vcmp.eq.s32.totalorder %v264, %v301
    %vm306 = vcmp.eq.s32.totalorder %v267, %v301
    %vm307 = vcmp.eq.s32.totalorder %v270, %v301
    %vm308 = vcmp.eq.s32.totalorder %v273, %v301
    %vm309 = vcmp.eq.s32.totalorder %v276, %v301
    %vm310 = vcmp.eq.s32.totalorder %v279, %v301
    %vm311 = vcmp.eq.s32.totalorder %v282, %v301
    %vm312 = vcmp.eq.s32.totalorder %v285, %v301
    %vm313 = vcmp.eq.s32.totalorder %v288, %v301
    %vm314 = vcmp.eq.s32.totalorder %v291, %v301
    %vm315 = vcmp.eq.s32.totalorder %v294, %v301
    %vm316 = vcmp.eq.s32.totalorder %v297, %v301
    %vm317 = vcmp.eq.s32.totalorder %v300, %v301
    %318 = vset.pattern.permute.xlu0 0
    %319 = vperm.xlu0 %318, %v235
    %v320 = vpop.permute.xlu0 %319
    %321 = vset.pattern.permute.xlu0 0
    %322 = vperm.xlu0 %321, %v236
    %v323 = vpop.permute.xlu0 %322
    %324 = vset.pattern.permute.xlu0 0
    %325 = vperm.xlu0 %324, %v237
    %v326 = vpop.permute.xlu0 %325
    %327 = vset.pattern.permute.xlu0 0
    %328 = vperm.xlu0 %327, %v238
    %v329 = vpop.permute.xlu0 %328
    %330 = vset.pattern.permute.xlu0 0
    %331 = vperm.xlu0 %330, %v239
    %v332 = vpop.permute.xlu0 %331
    %333 = vset.pattern.permute.xlu0 0
    %334 = vperm.xlu0 %333, %v240
    %v335 = vpop.permute.xlu0 %334
    %336 = vset.pattern.permute.xlu0 0
    %337 = vperm.xlu0 %336, %v241
    %v338 = vpop.permute.xlu0 %337
    %339 = vset.pattern.permute.xlu0 0
    %340 = vperm.xlu0 %339, %v242
    %v341 = vpop.permute.xlu0 %340
    %342 = vset.pattern.permute.xlu0 0
    %343 = vperm.xlu0 %342, %v243
    %v344 = vpop.permute.xlu0 %343
    %345 = vset.pattern.permute.xlu0 0
    %346 = vperm.xlu0 %345, %v244
    %v347 = vpop.permute.xlu0 %346
    %348 = vset.pattern.permute.xlu0 0
    %349 = vperm.xlu0 %348, %v245
    %v350 = vpop.permute.xlu0 %349
    %351 = vset.pattern.permute.xlu0 0
    %352 = vperm.xlu0 %351, %v246
    %v353 = vpop.permute.xlu0 %352
    %354 = vset.pattern.permute.xlu0 0
    %355 = vperm.xlu0 %354, %v247
    %v356 = vpop.permute.xlu0 %355
    %357 = vset.pattern.permute.xlu0 0
    %358 = vperm.xlu0 %357, %v248
    %v359 = vpop.permute.xlu0 %358
    %360 = vset.pattern.permute.xlu0 0
    %361 = vperm.xlu0 %360, %v249
    %v362 = vpop.permute.xlu0 %361
    %363 = vset.pattern.permute.xlu0 0
    %364 = vperm.xlu0 %363, %v250
    %v365 = vpop.permute.xlu0 %364
    %v366 = vperm.slane %v252, 0
    %vm367 = vcmp.eq.s32.totalorder %v320, %v366
    %vm368 = vcmp.eq.s32.totalorder %v323, %v366
    %vm369 = vcmp.eq.s32.totalorder %v326, %v366
    %vm370 = vcmp.eq.s32.totalorder %v329, %v366
    %vm371 = vcmp.eq.s32.totalorder %v332, %v366
    %vm372 = vcmp.eq.s32.totalorder %v335, %v366
    %vm373 = vcmp.eq.s32.totalorder %v338, %v366
    %vm374 = vcmp.eq.s32.totalorder %v341, %v366
    %vm375 = vcmp.eq.s32.totalorder %v344, %v366
    %vm376 = vcmp.eq.s32.totalorder %v347, %v366
    %vm377 = vcmp.eq.s32.totalorder %v350, %v366
    %vm378 = vcmp.eq.s32.totalorder %v353, %v366
    %vm379 = vcmp.eq.s32.totalorder %v356, %v366
    %vm380 = vcmp.eq.s32.totalorder %v359, %v366
    %vm381 = vcmp.eq.s32.totalorder %v362, %v366
    %vm382 = vcmp.eq.s32.totalorder %v365, %v366
    %vm383 = vmxor %vm367, 1
    %vm384 = vmxor %vm368, 1
    %vm385 = vmxor %vm369, 1
    %vm386 = vmxor %vm370, 1
    %vm387 = vmxor %vm371, 1
    %vm388 = vmxor %vm372, 1
    %vm389 = vmxor %vm373, 1
    %vm390 = vmxor %vm374, 1
    %vm391 = vmxor %vm375, 1
    %vm392 = vmxor %vm376, 1
    %vm393 = vmxor %vm377, 1
    %vm394 = vmxor %vm378, 1
    %vm395 = vmxor %vm379, 1
    %vm396 = vmxor %vm380, 1
    %vm397 = vmxor %vm381, 1
    %vm398 = vmxor %vm382, 1
    %vm399 = vmand %vm302, %vm383
    %vm400 = vmand %vm303, %vm384
    %vm401 = vmand %vm304, %vm385
    %vm402 = vmand %vm305, %vm386
    %vm403 = vmand %vm306, %vm387
    %vm404 = vmand %vm307, %vm388
    %vm405 = vmand %vm308, %vm389
    %vm406 = vmand %vm309, %vm390
    %vm407 = vmand %vm310, %vm391
    %vm408 = vmand %vm311, %vm392
    %vm409 = vmand %vm312, %vm393
    %vm410 = vmand %vm313, %vm394
    %vm411 = vmand %vm314, %vm395
    %vm412 = vmand %vm315, %vm396
    %vm413 = vmand %vm316, %vm397
    %vm414 = vmand %vm317, %vm398
    %vm415 = vmxor %vm302, 1
    %vm416 = vmxor %vm303, 1
    %vm417 = vmxor %vm304, 1
    %vm418 = vmxor %vm305, 1
    %vm419 = vmxor %vm306, 1
    %vm420 = vmxor %vm307, 1
    %vm421 = vmxor %vm308, 1
    %vm422 = vmxor %vm309, 1
    %vm423 = vmxor %vm310, 1
    %vm424 = vmxor %vm311, 1
    %vm425 = vmxor %vm312, 1
    %vm426 = vmxor %vm313, 1
    %vm427 = vmxor %vm314, 1
    %vm428 = vmxor %vm315, 1
    %vm429 = vmxor %vm316, 1
    %vm430 = vmxor %vm317, 1
    %vm431 = vcmp.lt.s32.totalorder %v235, 16
    %vm432 = vcmp.lt.s32.totalorder %v236, 16
    %vm433 = vcmp.lt.s32.totalorder %v237, 16
    %vm434 = vcmp.lt.s32.totalorder %v238, 16
    %vm435 = vcmp.lt.s32.totalorder %v239, 16
    %vm436 = vcmp.lt.s32.totalorder %v240, 16
    %vm437 = vcmp.lt.s32.totalorder %v241, 16
    %vm438 = vcmp.lt.s32.totalorder %v242, 16
    %vm439 = vcmp.lt.s32.totalorder %v243, 16
    %vm440 = vcmp.lt.s32.totalorder %v244, 16
    %vm441 = vcmp.lt.s32.totalorder %v245, 16
    %vm442 = vcmp.lt.s32.totalorder %v246, 16
    %vm443 = vcmp.lt.s32.totalorder %v247, 16
    %vm444 = vcmp.lt.s32.totalorder %v248, 16
    %vm445 = vcmp.lt.s32.totalorder %v249, 16
    %vm446 = vcmp.lt.s32.totalorder %v250, 16
    %v447 = vsel %vm431, 1, 0
    %v448 = vsel %vm432, 1, 0
    %v449 = vsel %vm433, 1, 0
    %v450 = vsel %vm434, 1, 0
    %v451 = vsel %vm435, 1, 0
    %v452 = vsel %vm436, 1, 0
    %v453 = vsel %vm437, 1, 0
    %v454 = vsel %vm438, 1, 0
    %v455 = vsel %vm439, 1, 0
    %v456 = vsel %vm440, 1, 0
    %v457 = vsel %vm441, 1, 0
    %v458 = vsel %vm442, 1, 0
    %v459 = vsel %vm443, 1, 0
    %v460 = vsel %vm444, 1, 0
    %v461 = vsel %vm445, 1, 0
    %v462 = vsel %vm446, 1, 0
    %463 = vset.pattern.permute.xlu0 0
    %464 = vperm.xlu0 %463, %v447
    %v465 = vpop.permute.xlu0 %464
    %466 = vset.pattern.permute.xlu0 0
    %467 = vperm.xlu0 %466, %v448
    %v468 = vpop.permute.xlu0 %467
    %469 = vset.pattern.permute.xlu0 0
    %470 = vperm.xlu0 %469, %v449
    %v471 = vpop.permute.xlu0 %470
    %472 = vset.pattern.permute.xlu0 0
    %473 = vperm.xlu0 %472, %v450
    %v474 = vpop.permute.xlu0 %473
    %475 = vset.pattern.permute.xlu0 0
    %476 = vperm.xlu0 %475, %v451
    %v477 = vpop.permute.xlu0 %476
    %478 = vset.pattern.permute.xlu0 0
    %479 = vperm.xlu0 %478, %v452
    %v480 = vpop.permute.xlu0 %479
    %481 = vset.pattern.permute.xlu0 0
    %482 = vperm.xlu0 %481, %v453
    %v483 = vpop.permute.xlu0 %482
    %484 = vset.pattern.permute.xlu0 0
    %485 = vperm.xlu0 %484, %v454
    %v486 = vpop.permute.xlu0 %485
    %487 = vset.pattern.permute.xlu0 0
    %488 = vperm.xlu0 %487, %v455
    %v489 = vpop.permute.xlu0 %488
    %490 = vset.pattern.permute.xlu0 0
    %491 = vperm.xlu0 %490, %v456
    %v492 = vpop.permute.xlu0 %491
    %493 = vset.pattern.permute.xlu0 0
    %494 = vperm.xlu0 %493, %v457
    %v495 = vpop.permute.xlu0 %494
    %496 = vset.pattern.permute.xlu0 0
    %497 = vperm.xlu0 %496, %v458
    %v498 = vpop.permute.xlu0 %497
    %499 = vset.pattern.permute.xlu0 0
    %500 = vperm.xlu0 %499, %v459
    %v501 = vpop.permute.xlu0 %500
    %502 = vset.pattern.permute.xlu0 0
    %503 = vperm.xlu0 %502, %v460
    %v504 = vpop.permute.xlu0 %503
    %505 = vset.pattern.permute.xlu0 0
    %506 = vperm.xlu0 %505, %v461
    %v507 = vpop.permute.xlu0 %506
    %508 = vset.pattern.permute.xlu0 0
    %509 = vperm.xlu0 %508, %v462
    %v510 = vpop.permute.xlu0 %509
    %vm511 = vcmp.eq.s32.totalorder %v465, 1
    %vm512 = vcmp.eq.s32.totalorder %v468, 1
    %vm513 = vcmp.eq.s32.totalorder %v471, 1
    %vm514 = vcmp.eq.s32.totalorder %v474, 1
    %vm515 = vcmp.eq.s32.totalorder %v477, 1
    %vm516 = vcmp.eq.s32.totalorder %v480, 1
    %vm517 = vcmp.eq.s32.totalorder %v483, 1
    %vm518 = vcmp.eq.s32.totalorder %v486, 1
    %vm519 = vcmp.eq.s32.totalorder %v489, 1
    %vm520 = vcmp.eq.s32.totalorder %v492, 1
    %vm521 = vcmp.eq.s32.totalorder %v495, 1
    %vm522 = vcmp.eq.s32.totalorder %v498, 1
    %vm523 = vcmp.eq.s32.totalorder %v501, 1
    %vm524 = vcmp.eq.s32.totalorder %v504, 1
    %vm525 = vcmp.eq.s32.totalorder %v507, 1
    %vm526 = vcmp.eq.s32.totalorder %v510, 1
    %vm527 = vmand %vm415, %vm511
    %vm528 = vmand %vm416, %vm512
    %vm529 = vmand %vm417, %vm513
    %vm530 = vmand %vm418, %vm514
    %vm531 = vmand %vm419, %vm515
    %vm532 = vmand %vm420, %vm516
    %vm533 = vmand %vm421, %vm517
    %vm534 = vmand %vm422, %vm518
    %vm535 = vmand %vm423, %vm519
    %vm536 = vmand %vm424, %vm520
    %vm537 = vmand %vm425, %vm521
    %vm538 = vmand %vm426, %vm522
    %vm539 = vmand %vm427, %vm523
    %vm540 = vmand %vm428, %vm524
    %vm541 = vmand %vm429, %vm525
    %vm542 = vmand %vm430, %vm526
    %v543 = vsel %vm511, %v203, -1e+30
    %v544 = vsel %vm512, %v204, -1e+30
    %v545 = vsel %vm513, %v205, -1e+30
    %v546 = vsel %vm514, %v206, -1e+30
    %v547 = vsel %vm515, %v207, -1e+30
    %v548 = vsel %vm516, %v208, -1e+30
    %v549 = vsel %vm517, %v209, -1e+30
    %v550 = vsel %vm518, %v210, -1e+30
    %v551 = vsel %vm519, %v211, -1e+30
    %v552 = vsel %vm520, %v212, -1e+30
    %v553 = vsel %vm521, %v213, -1e+30
    %v554 = vsel %vm522, %v214, -1e+30
    %v555 = vsel %vm523, %v215, -1e+30
    %v556 = vsel %vm524, %v216, -1e+30
    %v557 = vsel %vm525, %v217, -1e+30
    %v558 = vsel %vm526, %v218, -1e+30
    %v559 = vmax.f32 %v543, %v547
    %v560 = vmax.f32 %v544, %v548
    %v561 = vmax.f32 %v545, %v549
    %v562 = vmax.f32 %v546, %v550
    %v563 = vmax.f32 %v559, %v551
    %v564 = vmax.f32 %v560, %v552
    %v565 = vmax.f32 %v561, %v553
    %v566 = vmax.f32 %v562, %v554
    %v567 = vmax.f32 %v563, %v555
    %v568 = vmax.f32 %v564, %v556
    %v569 = vmax.f32 %v565, %v557
    %v570 = vmax.f32 %v566, %v558
    %v571 = vmax.f32 %v567, %v568
    %v572 = vmax.f32 %v569, %v570
    %v573 = vmax.f32 %v571, %v572
    %v574 = vrot.slane %v573, 4
    %v575 = vmax.f32 %v573, %v574
    %v576 = vrot.slane %v575, 2
    %v577 = vmax.f32 %v575, %v576
    %v578 = vrot.slane %v577, 1
    %v579 = vmax.f32 %v577, %v578
    %v580 = vsub.f32 %v203, %v579
    %v581 = vsub.f32 %v204, %v579
    %v582 = vsub.f32 %v205, %v579
    %v583 = vsub.f32 %v206, %v579
    %v584 = vsub.f32 %v207, %v579
    %v585 = vsub.f32 %v208, %v579
    %v586 = vsub.f32 %v209, %v579
    %v587 = vsub.f32 %v210, %v579
    %v588 = vsub.f32 %v211, %v579
    %v589 = vsub.f32 %v212, %v579
    %v590 = vsub.f32 %v213, %v579
    %v591 = vsub.f32 %v214, %v579
    %v592 = vsub.f32 %v215, %v579
    %v593 = vsub.f32 %v216, %v579
    %v594 = vsub.f32 %v217, %v579
    %v595 = vsub.f32 %v218, %v579
    %v596 = vmul.f32 %v580, 1.442695
    %v597 = vpow.pop %v596
    %v598 = vmul.f32 %v581, 1.442695
    %v599 = vpow.pop %v598
    %v600 = vmul.f32 %v582, 1.442695
    %v601 = vpow.pop %v600
    %v602 = vmul.f32 %v583, 1.442695
    %v603 = vpow.pop %v602
    %v604 = vmul.f32 %v584, 1.442695
    %v605 = vpow.pop %v604
    %v606 = vmul.f32 %v585, 1.442695
    %v607 = vpow.pop %v606
    %v608 = vmul.f32 %v586, 1.442695
    %v609 = vpow.pop %v608
    %v610 = vmul.f32 %v587, 1.442695
    %v611 = vpow.pop %v610
    %v612 = vmul.f32 %v588, 1.442695
    %v613 = vpow.pop %v612
    %v614 = vmul.f32 %v589, 1.442695
    %v615 = vpow.pop %v614
    %v616 = vmul.f32 %v590, 1.442695
    %v617 = vpow.pop %v616
    %v618 = vmul.f32 %v591, 1.442695
    %v619 = vpow.pop %v618
    %v620 = vmul.f32 %v592, 1.442695
    %v621 = vpow.pop %v620
    %v622 = vmul.f32 %v593, 1.442695
    %v623 = vpow.pop %v622
    %v624 = vmul.f32 %v594, 1.442695
    %v625 = vpow.pop %v624
    %v626 = vmul.f32 %v595, 1.442695
    %v627 = vpow.pop %v626
    %v628 = vsel %vm527, %v597, 0.0
    %v629 = vsel %vm528, %v599, 0.0
    %v630 = vsel %vm529, %v601, 0.0
    %v631 = vsel %vm530, %v603, 0.0
    %v632 = vsel %vm531, %v605, 0.0
    %v633 = vsel %vm532, %v607, 0.0
    %v634 = vsel %vm533, %v609, 0.0
    %v635 = vsel %vm534, %v611, 0.0
    %v636 = vsel %vm535, %v613, 0.0
    %v637 = vsel %vm536, %v615, 0.0
    %v638 = vsel %vm537, %v617, 0.0
    %v639 = vsel %vm538, %v619, 0.0
    %v640 = vsel %vm539, %v621, 0.0
    %v641 = vsel %vm540, %v623, 0.0
    %v642 = vsel %vm541, %v625, 0.0
    %v643 = vsel %vm542, %v627, 0.0
    %v644 = vadd.f32 %v628, %v629
    %v645 = vadd.f32 %v644, %v630
    %v646 = vadd.f32 %v645, %v631
    %v647 = vadd.f32 %v646, %v632
    %v648 = vadd.f32 %v647, %v633
    %v649 = vadd.f32 %v648, %v634
    %v650 = vadd.f32 %v649, %v635
    %v651 = vadd.f32 %v650, %v636
    %v652 = vadd.f32 %v651, %v637
    %v653 = vadd.f32 %v652, %v638
    %v654 = vadd.f32 %v653, %v639
    %v655 = vadd.f32 %v654, %v640
    %v656 = vadd.f32 %v655, %v641
    %v657 = vadd.f32 %v656, %v642
    %v658 = vadd.f32 %v657, %v643
    %v659 = vrot.slane %v658, 4
    %v660 = vadd.f32 %v658, %v659
    %v661 = vrot.slane %v660, 2
    %v662 = vadd.f32 %v660, %v661
    %v663 = vrot.slane %v662, 1
    %v664 = vadd.f32 %v662, %v663
    %v665 = vlog2.pop %v664
    %v666 = vmul.f32 %v665, 0.6931472
    %v667 = vsel %vm399, %v580, 0.0
    %v668 = vsel %vm400, %v581, 0.0
    %v669 = vsel %vm401, %v582, 0.0
    %v670 = vsel %vm402, %v583, 0.0
    %v671 = vsel %vm403, %v584, 0.0
    %v672 = vsel %vm404, %v585, 0.0
    %v673 = vsel %vm405, %v586, 0.0
    %v674 = vsel %vm406, %v587, 0.0
    %v675 = vsel %vm407, %v588, 0.0
    %v676 = vsel %vm408, %v589, 0.0
    %v677 = vsel %vm409, %v590, 0.0
    %v678 = vsel %vm410, %v591, 0.0
    %v679 = vsel %vm411, %v592, 0.0
    %v680 = vsel %vm412, %v593, 0.0
    %v681 = vsel %vm413, %v594, 0.0
    %v682 = vsel %vm414, %v595, 0.0
    %v683 = vadd.f32 %v667, %v668
    %v684 = vadd.f32 %v683, %v669
    %v685 = vadd.f32 %v684, %v670
    %v686 = vadd.f32 %v685, %v671
    %v687 = vadd.f32 %v686, %v672
    %v688 = vadd.f32 %v687, %v673
    %v689 = vadd.f32 %v688, %v674
    %v690 = vadd.f32 %v689, %v675
    %v691 = vadd.f32 %v690, %v676
    %v692 = vadd.f32 %v691, %v677
    %v693 = vadd.f32 %v692, %v678
    %v694 = vadd.f32 %v693, %v679
    %v695 = vadd.f32 %v694, %v680
    %v696 = vadd.f32 %v695, %v681
    %v697 = vadd.f32 %v696, %v682
    %v698 = vrot.slane %v697, 4
    %v699 = vadd.f32 %v697, %v698
    %v700 = vrot.slane %v699, 2
    %v701 = vadd.f32 %v699, %v700
    %v702 = vrot.slane %v701, 1
    %v703 = vadd.f32 %v701, %v702
    %v704 = vsub.f32 %v703, %v666
    %v705 = vmul.f32 %v704, -1.0
    %vm706 = vcmp.lt.s32.totalorder %v252, 16
    %v707 = vsel %vm706, %v705, 0.0
    %708 = vst [vmem:[#allocation2] sm:$0x1] %v707
    // Predicated region
    $region22: #{tpu_custom_call.1} parent=1 // pred_check
      _
    $region23: #{tpu_custom_call.1} parent=1 // pred_check_branch
      %710 = sbr.rel (0) target = $region25
    $region24: #{tpu_custom_call.1} parent=1 // pred_region
      %712 = vsyncadd [#allocation3], 0
      %s714 = sshll.u32 [#allocation2], 4
      %s715 = int_to_ptr.vmem [resolvable:$true] %s714
      %s716 = sshll.u32 %s5, 4
      %s717 = int_to_ptr.hbm [resolvable:$true] %s716
      %719 = dma.vmem_to_hbm [thread:$0]  %s715, 16, %s717, [#allocation3]
    $region25: #{tpu_custom_call.1} parent=1 // pred_fallthru
      _
    // Predicated region
    $region26: #{tpu_custom_call.1} parent=1 // pred_check
      _
    $region27: #{tpu_custom_call.1} parent=1 // pred_check_branch
      %721 = sbr.rel (0) target = $region29
    $region28: #{tpu_custom_call.1} parent=1 // pred_region
      %723 = dma.done [#allocation3], 16
    $region29: #{tpu_custom_call.1} parent=1 // pred_fallthru
      _
    %724 = vsyncpa [#allocation3], 1

</llo_original>
